<compile_context>
chip_gen: v7x
topology: tpu7x:2x2x1
jax: 0.10.0
libtpu: 0.0.40
codegen_flags: <defaults>
</compile_context>

<pallas_src>
import functools

import numpy as np
import jax
import jax.numpy as jnp
from jax.experimental import pallas as pl
from jax.experimental.pallas import tpu as pltpu  # noqa: F401  (kept for TODO items)


# ----------------------------- config ------------------------------------- #
class Cfg:
    context_size = 16
    vocab_size = 256
    n_layer = 2
    n_head = 4
    d_model = 32
    d_hidden = 32
    rope_theta = 10000.0


# --------------------------- kernel helpers -------------------------------- #
def _rms(x, w, eps=1e-6):
    # x: (rows, C) float32, w: (1, C)
    var = jnp.mean(x * x, axis=-1, keepdims=True)
    return x * jax.lax.rsqrt(var + eps) * w


# ------------------------ fused transformer kernel ------------------------- #
def fused_transformer_kernel(
    x_ref, cos2_ref, sin2_ref, r2_ref, rep_ref, hm_ref, gsum_ref, cmask_ref,
    sel_ref, n1_ref, wqkv_ref, wproj_ref, n2_ref, wfc12_ref, wfc3_ref,
    normw_ref, wlm_ref, blm_ref, o_ref, *, scale, n_layer):
    """Single invocation: rows = B*N (batch folded into sublanes), layers unrolled."""
    xa = x_ref[...]                       # (R, C) f32 residual stream, R = B*N
    R, C = xa.shape

    cos2 = cos2_ref[...]                  # (R, 2C)
    sin2 = sin2_ref[...]
    rep = rep_ref[...]                    # (B*H*N, R)
    hm = hm_ref[...]                      # (B*H*N, C)
    gsum = gsum_ref[...]                  # (B*H*N, B*H*N)
    cmask = cmask_ref[...]                # (R, B*H*N) additive causal+batch mask
    r2 = r2_ref[...]                      # (2C, 2C) block-diag rotate_half matrix

    for l in range(n_layer):              # L=2: fully unrolled, static ref slices
        # ---------------- attention ----------------
        h = _rms(xa, n1_ref[l])                                              # (R, C)
        qkv = jnp.dot(h, wqkv_ref[l], preferred_element_type=jnp.float32)    # (R, 3C)
        qk = qkv[:, :2 * C]
        v = qkv[:, 2 * C:]

        # RoPE on the q/k slab only (rotate_half expressed as a constant matmul).
        # TODO(synk): at larger C use pltpu.roll lane permutes on the XLU instead.
        qk = qk * cos2 + jnp.dot(qk, r2, preferred_element_type=jnp.float32) * sin2
        q = qk[:, :C]
        k = qk[:, C:]

        # Head/batch-stacked attention via constant matrices (no per-head loop):
        #   rep   : replicates K/V rows once per head (within each batch element)
        #   hm    : zeroes lanes not belonging to that head
        #   gsum  : per-(batch, head) group-sum for the softmax denominator
        #   cmask : additive causal + cross-batch mask (0 / -1e30)
        ktile = jnp.dot(rep, k, preferred_element_type=jnp.float32) * hm     # (BHN, C)
        vtile = jnp.dot(rep, v, preferred_element_type=jnp.float32) * hm     # (BHN, C)

        # NT matmul; any lowering transpose here is negligible at these sizes
        # (see review) -- revisit with a (C, BHN)-layout ktile when scaling.
        s = (jnp.einsum('rc,jc->rj', q, ktile,
                        preferred_element_type=jnp.float32) * scale
             + cmask)                                                        # (R, BHN)
        m = jnp.max(s, axis=-1, keepdims=True)       # shared row max cancels per group
        p = jnp.exp(s - m)
        den = jnp.dot(p, gsum, preferred_element_type=jnp.float32)
        # cross-batch groups are fully masked (p == 0, den == 0): guard 0 * inf
        den = jnp.maximum(den, 1e-30)
        p = p * pl.reciprocal(den, approx=True)

        attn = jnp.dot(p, vtile, preferred_element_type=jnp.float32)         # (R, C)
        xa = xa + jnp.dot(attn, wproj_ref[l], preferred_element_type=jnp.float32)

        # ---------------- SwiGLU FFN ----------------
        h2 = _rms(xa, n2_ref[l])
        a = jnp.dot(h2, wfc12_ref[l], preferred_element_type=jnp.float32)    # (R, 2*dh)
        dh = a.shape[-1] // 2
        x1 = a[:, :dh]
        x2 = a[:, dh:]
        g = x1 * (x2 * jax.nn.sigmoid(x2))                                   # x1 * SiLU(x2)
        xa = xa + jnp.dot(g, wfc3_ref[l], preferred_element_type=jnp.float32)

    # ---------------- final norm + lm_head (last token of each batch) -------
    xlast = jnp.dot(sel_ref[...], xa, preferred_element_type=jnp.float32)    # (B, C)
    xn = _rms(xlast, normw_ref[...])
    o_ref[...] = (jnp.dot(xn, wlm_ref[...], preferred_element_type=jnp.float32)
                  + blm_ref[...])                                            # (B, V)


# ---------------------- wrapper: tables / constants ------------------------ #
def _rope_tables(position_ids, C, H, hd, theta):
    """(B*N, 2C) cos/sin tables for the q/k slab (batch folded into rows)."""
    B, N = position_ids.shape
    inv_freq = 1.0 / (theta ** (jnp.arange(0, hd, 2, dtype=jnp.float32) / hd))
    freqs = position_ids.astype(jnp.float32)[:, :, None] * inv_freq[None, None, :]
    emb = jnp.concatenate([freqs, freqs], axis=-1)          # (B, N, hd)
    cos = jnp.cos(emb)
    sin = jnp.sin(emb)
    cos_t = jnp.tile(cos, (1, 1, H))                        # (B, N, C) per-head tiled
    sin_t = jnp.tile(sin, (1, 1, H))
    cos2 = jnp.concatenate([cos_t, cos_t], axis=-1).reshape(B * N, 2 * C)
    sin2 = jnp.concatenate([sin_t, sin_t], axis=-1).reshape(B * N, 2 * C)
    return cos2, sin2


def _attention_constants(B, N, C, H, hd):
    half = hd // 2
    # rotate_half as a matmul: (q @ R)[:, h*hd+j] = -q[:, h*hd+j+half]  (j <  half)
    #                                             = +q[:, h*hd+j-half]  (j >= half)
    R = np.zeros((C, C), np.float32)
    for h in range(H):
        base = h * hd
        for j in range(half):
            R[base + j + half, base + j] = -1.0
            R[base + j, base + j + half] = 1.0
    R2 = np.zeros((2 * C, 2 * C), np.float32)               # q slab + k slab
    R2[:C, :C] = R
    R2[C:, C:] = R

    BHN = B * H * N
    rep = np.zeros((BHN, B * N), np.float32)      # rep[(b,h,k), (b,k)] = 1
    hm = np.zeros((BHN, C), np.float32)           # hm[(b,h,k), c] = 1 iff c//hd == h
    for b in range(B):
        for h in range(H):
            base = b * H * N + h * N
            for kk in range(N):
                rep[base + kk, b * N + kk] = 1.0
            hm[base:base + N, h * hd:(h + 1) * hd] = 1.0

    gsum = np.zeros((BHN, BHN), np.float32)       # block-diag ones per (batch, head)
    for g in range(B * H):
        gsum[g * N:(g + 1) * N, g * N:(g + 1) * N] = 1.0

    cmask = np.full((B * N, BHN), -1e30, np.float32)   # additive causal + batch mask
    for b in range(B):
        for qq in range(N):
            row = b * N + qq
            for h in range(H):
                base = b * H * N + h * N
                cmask[row, base:base + qq + 1] = 0.0

    sel_last = np.zeros((B, B * N), np.float32)   # selects last token of each batch
    for b in range(B):
        sel_last[b, b * N + N - 1] = 1.0

    return (jnp.asarray(R2), jnp.asarray(rep), jnp.asarray(hm),
            jnp.asarray(gsum), jnp.asarray(cmask), jnp.asarray(sel_last))


# ------------------------------ wrapper ------------------------------------ #
def transformer_forward(params, tokens, position_ids, cfg):
    B, N = tokens.shape
    C, H, V = cfg.d_model, cfg.n_head, cfg.vocab_size
    L, dh = cfg.n_layer, cfg.d_hidden
    hd = C // H

    # token embedding gather stays in plain JAX glue; fold batch into rows
    x = params['emb'][tokens].astype(jnp.float32).reshape(B * N, C)   # (B*N, C)

    cos2, sin2 = _rope_tables(position_ids, C, H, hd, cfg.rope_theta)
    r2, rep, hm, gsum, cmask, sel_last = _attention_constants(B, N, C, H, hd)

    blocks = params['blocks']
    n1_s = jnp.stack([lp['n1'] for lp in blocks])               # (L, 1, C)
    wqkv_s = jnp.stack([lp['wqkv'] for lp in blocks])           # (L, C, 3C)
    wproj_s = jnp.stack([lp['wproj'] for lp in blocks])         # (L, C, C)
    n2_s = jnp.stack([lp['n2'] for lp in blocks])               # (L, 1, C)
    wfc12_s = jnp.stack([lp['wfc12'] for lp in blocks])         # (L, C, 2*dh)
    wfc3_s = jnp.stack([lp['wfc3'] for lp in blocks])           # (L, dh, C)

    kernel = functools.partial(fused_transformer_kernel,
                               scale=1.0 / (hd ** 0.5), n_layer=L)

    # Single invocation (no grid): every input is a full-array VMEM block,
    # fetched exactly once.  Output is one lane-dense (B, V) slab.
    logits = pl.pallas_call(
        kernel,
        out_shape=jax.ShapeDtypeStruct((B, V), jnp.float32),
    )(x, cos2, sin2, r2, rep, hm, gsum, cmask, sel_last,
      n1_s, wqkv_s, wproj_s, n2_s, wfc12_s, wfc3_s,
      params['norm_w'], params['wlm'], params['blm'])

    return logits[:, None, :], None                              # (B, 1, V), loss=None


# --------------------------- pure-JAX reference ----------------------------- #
def _ref_forward(params, tokens, position_ids, cfg):
    B, N = tokens.shape
    C = cfg.d_model
    H = cfg.n_head
    hd = C // H
    x = params['emb'][tokens].astype(jnp.float32)

    inv_freq = 1.0 / (cfg.rope_theta **
                      (jnp.arange(0, hd, 2, dtype=jnp.float32) / hd))
    freqs = position_ids.astype(jnp.float32)[:, :, None] * inv_freq[None, None, :]
    emb = jnp.concatenate([freqs, freqs], axis=-1)
    cos, sin = jnp.cos(emb), jnp.sin(emb)

    def rms(v, w):
        var = jnp.mean(v * v, axis=-1, keepdims=True)
        return v * jax.lax.rsqrt(var + 1e-6) * w[0]

    def rope(t):
        t1, t2 = t[..., :hd // 2], t[..., hd // 2:]
        return t * cos[:, None] + jnp.concatenate([-t2, t1], -1) * sin[:, None]

    causal = jnp.tril(jnp.ones((N, N), bool))
    for lp in params['blocks']:
        h = rms(x, lp['n1'])
        qkv = h @ lp['wqkv']
        q, k, v = jnp.split(qkv, 3, axis=-1)

        def heads(t):
            return t.reshape(B, N, H, hd).transpose(0, 2, 1, 3)
        q, k, v = heads(q), heads(k), heads(v)
        q, k = rope(q), rope(k)
        s = jnp.einsum('bhqd,bhkd->bhqk', q, k) / (hd ** 0.5)
        s = jnp.where(causal[None, None], s, -1e30)
        p = jax.nn.softmax(s, axis=-1)
        o = jnp.einsum('bhqk,bhkd->bhqd', p, v).transpose(0, 2, 1, 3).reshape(B, N, C)
        x = x + o @ lp['wproj']
        h2 = rms(x, lp['n2'])
        a = h2 @ lp['wfc12']
        x1, x2 = jnp.split(a, 2, axis=-1)
        x = x + (x1 * jax.nn.silu(x2)) @ lp['wfc3']
    xl = rms(x[:, -1, :], params['norm_w'])
    return (xl @ params['wlm'] + params['blm'])[:, None, :]


# ------------------------------- params ------------------------------------ #
def init_params(key, cfg):
    C, dh, V = cfg.d_model, cfg.d_hidden, cfg.vocab_size
    keys = jax.random.split(key, 3 + 5 * cfg.n_layer)
    ki = iter(range(len(keys)))
    p = {
        'emb': jax.random.normal(keys[next(ki)], (V, C), jnp.float32) * 0.02,
        'norm_w': jnp.ones((1, C), jnp.float32),
        'wlm': jax.random.normal(keys[next(ki)], (C, V), jnp.float32) * 0.02,
        'blm': jax.random.normal(keys[next(ki)], (1, V), jnp.float32) * 0.01,
        'blocks': [],
    }
    for _ in range(cfg.n_layer):
        p['blocks'].append({
            'n1': jnp.ones((1, C), jnp.float32),
            'n2': jnp.ones((1, C), jnp.float32),
            'wqkv': jax.random.normal(keys[next(ki)], (C, 3 * C), jnp.float32) * 0.02,
            'wproj': jax.random.normal(keys[next(ki)], (C, C), jnp.float32) * 0.02,
            'wfc12': jax.random.normal(keys[next(ki)], (C, 2 * dh), jnp.float32) * 0.02,
            'wfc3': jax.random.normal(keys[next(ki)], (dh, C), jnp.float32) * 0.02,
        })
    return p


# -------------------------------- main -------------------------------------- #
if __name__ == "__main__":
    cfg = Cfg()
    B, N = 2, 8

    key = jax.random.PRNGKey(0)
    kp, kt = jax.random.split(key)
    params = init_params(kp, cfg)

    tokens = jax.random.randint(kt, (B, N), 0, cfg.vocab_size, dtype=jnp.int32)
    position_ids = jnp.tile(jnp.arange(N, dtype=jnp.int32)[None, :], (B, 1))

    logits, loss = transformer_forward(params, tokens, position_ids, cfg)
    logits = jax.block_until_ready(logits)
    assert logits.shape == (B, 1, cfg.vocab_size)
    assert loss is None
    assert bool(jnp.all(jnp.isfinite(logits)))

    ref = jax.block_until_ready(_ref_forward(params, tokens, position_ids, cfg))
    # tolerance loosened slightly for the approx (EUP) softmax reciprocal
    assert bool(jnp.allclose(logits, ref, rtol=1e-3, atol=1e-3)), \
        f"max abs diff = {float(jnp.max(jnp.abs(logits - ref)))}"

    print("KERNEL_OK")
</pallas_src>

<mosaic_0001>
module attributes {stable_mosaic.version = 11 : i64} {
  func.func @fused_transformer_kernel(%arg0: memref<16x32xf32, #tpu.memory_space<vmem>>, %arg1: memref<16x64xf32, #tpu.memory_space<vmem>>, %arg2: memref<16x64xf32, #tpu.memory_space<vmem>>, %arg3: memref<64x64xf32, #tpu.memory_space<vmem>>, %arg4: memref<64x16xf32, #tpu.memory_space<vmem>>, %arg5: memref<64x32xf32, #tpu.memory_space<vmem>>, %arg6: memref<64x64xf32, #tpu.memory_space<vmem>>, %arg7: memref<16x64xf32, #tpu.memory_space<vmem>>, %arg8: memref<2x16xf32, #tpu.memory_space<vmem>>, %arg9: memref<2x1x32xf32, #tpu.memory_space<vmem>>, %arg10: memref<2x32x96xf32, #tpu.memory_space<vmem>>, %arg11: memref<2x32x32xf32, #tpu.memory_space<vmem>>, %arg12: memref<2x1x32xf32, #tpu.memory_space<vmem>>, %arg13: memref<2x32x64xf32, #tpu.memory_space<vmem>>, %arg14: memref<2x32x32xf32, #tpu.memory_space<vmem>>, %arg15: memref<1x32xf32, #tpu.memory_space<vmem>>, %arg16: memref<32x256xf32, #tpu.memory_space<vmem>>, %arg17: memref<1x256xf32, #tpu.memory_space<vmem>>, %arg18: memref<2x256xf32, #tpu.memory_space<vmem>>) attributes {dimension_semantics = [], scalar_prefetch = 0 : i64, scratch_operands = 0 : i64, tpu.core_type = #tpu.core_type<tc>} {
    %c0 = arith.constant 0 : index
    %c0_0 = arith.constant 0 : index
    %0 = vector.load %arg0[%c0, %c0_0] : memref<16x32xf32, #tpu.memory_space<vmem>>, vector<16x32xf32>
    %c0_1 = arith.constant 0 : index
    %c0_2 = arith.constant 0 : index
    %1 = vector.load %arg1[%c0_1, %c0_2] : memref<16x64xf32, #tpu.memory_space<vmem>>, vector<16x64xf32>
    %c0_3 = arith.constant 0 : index
    %c0_4 = arith.constant 0 : index
    %2 = vector.load %arg2[%c0_3, %c0_4] : memref<16x64xf32, #tpu.memory_space<vmem>>, vector<16x64xf32>
    %c0_5 = arith.constant 0 : index
    %c0_6 = arith.constant 0 : index
    %3 = vector.load %arg4[%c0_5, %c0_6] : memref<64x16xf32, #tpu.memory_space<vmem>>, vector<64x16xf32>
    %c0_7 = arith.constant 0 : index
    %c0_8 = arith.constant 0 : index
    %4 = vector.load %arg5[%c0_7, %c0_8] : memref<64x32xf32, #tpu.memory_space<vmem>>, vector<64x32xf32>
    %c0_9 = arith.constant 0 : index
    %c0_10 = arith.constant 0 : index
    %5 = vector.load %arg6[%c0_9, %c0_10] : memref<64x64xf32, #tpu.memory_space<vmem>>, vector<64x64xf32>
    %c0_11 = arith.constant 0 : index
    %c0_12 = arith.constant 0 : index
    %6 = vector.load %arg7[%c0_11, %c0_12] : memref<16x64xf32, #tpu.memory_space<vmem>>, vector<16x64xf32>
    %c0_13 = arith.constant 0 : index
    %c0_14 = arith.constant 0 : index
    %7 = vector.load %arg3[%c0_13, %c0_14] : memref<64x64xf32, #tpu.memory_space<vmem>>, vector<64x64xf32>
    %c0_15 = arith.constant 0 : index
    %c0_16 = arith.constant 0 : index
    %c0_17 = arith.constant 0 : index
    %8 = vector.load %arg9[%c0_15, %c0_16, %c0_17] : memref<2x1x32xf32, #tpu.memory_space<vmem>>, vector<1x1x32xf32>
    %9 = vector.shape_cast %8 : vector<1x1x32xf32> to vector<1x32xf32>
    %10 = arith.mulf %0, %0 : vector<16x32xf32>
    %cst = arith.constant dense<0.000000e+00> : vector<16xf32>
    %11 = vector.multi_reduction <add>, %10, %cst [1] : vector<16x32xf32> to vector<16xf32>
    %12 = vector.shape_cast %11 : vector<16xf32> to vector<16x1xf32>
    %cst_18 = arith.constant 3.200000e+01 : f32
    %13 = vector.broadcast %cst_18 : f32 to vector<16x1xf32>
    %14 = arith.divf %12, %13 : vector<16x1xf32>
    %cst_19 = arith.constant 9.99999997E-7 : f32
    %15 = vector.broadcast %cst_19 : f32 to vector<16x1xf32>
    %16 = arith.addf %14, %15 : vector<16x1xf32>
    %17 = math.rsqrt %16 : vector<16x1xf32>
    %18 = vector.broadcast %17 : vector<16x1xf32> to vector<16x32xf32>
    %19 = arith.mulf %0, %18 : vector<16x32xf32>
    %20 = vector.broadcast %9 : vector<1x32xf32> to vector<16x32xf32>
    %21 = arith.mulf %19, %20 : vector<16x32xf32>
    %c0_20 = arith.constant 0 : index
    %c0_21 = arith.constant 0 : index
    %c0_22 = arith.constant 0 : index
    %22 = vector.load %arg10[%c0_20, %c0_21, %c0_22] : memref<2x32x96xf32, #tpu.memory_space<vmem>>, vector<1x32x96xf32>
    %23 = vector.shape_cast %22 : vector<1x32x96xf32> to vector<32x96xf32>
    %cst_23 = arith.constant dense<0.000000e+00> : vector<16x96xf32>
    %24 = tpu.matmul %21, %23, %cst_23 {dimension_numbers = #tpu.dot_dimension_numbers<[1], [0], [0], [1], [0, 0, 1, 1], [], []>} : vector<16x32xf32>, vector<32x96xf32>, vector<16x96xf32> -> vector<16x96xf32>
    %25 = vector.extract_strided_slice %24 {offsets = [0, 0], sizes = [16, 64], strides = [1, 1]} : vector<16x96xf32> to vector<16x64xf32>
    %26 = vector.extract_strided_slice %24 {offsets = [0, 64], sizes = [16, 32], strides = [1, 1]} : vector<16x96xf32> to vector<16x32xf32>
    %27 = arith.mulf %25, %1 : vector<16x64xf32>
    %cst_24 = arith.constant dense<0.000000e+00> : vector<16x64xf32>
    %28 = tpu.matmul %25, %7, %cst_24 {dimension_numbers = #tpu.dot_dimension_numbers<[1], [0], [0], [1], [0, 0, 1, 1], [], []>} : vector<16x64xf32>, vector<64x64xf32>, vector<16x64xf32> -> vector<16x64xf32>
    %29 = arith.mulf %28, %2 : vector<16x64xf32>
    %30 = arith.addf %27, %29 : vector<16x64xf32>
    %31 = vector.extract_strided_slice %30 {offsets = [0, 0], sizes = [16, 32], strides = [1, 1]} : vector<16x64xf32> to vector<16x32xf32>
    %32 = vector.extract_strided_slice %30 {offsets = [0, 32], sizes = [16, 32], strides = [1, 1]} : vector<16x64xf32> to vector<16x32xf32>
    %cst_25 = arith.constant dense<0.000000e+00> : vector<64x32xf32>
    %33 = tpu.matmul %3, %32, %cst_25 {dimension_numbers = #tpu.dot_dimension_numbers<[1], [0], [0], [1], [0, 0, 1, 1], [], []>} : vector<64x16xf32>, vector<16x32xf32>, vector<64x32xf32> -> vector<64x32xf32>
    %34 = arith.mulf %33, %4 : vector<64x32xf32>
    %cst_26 = arith.constant dense<0.000000e+00> : vector<64x32xf32>
    %35 = tpu.matmul %3, %26, %cst_26 {dimension_numbers = #tpu.dot_dimension_numbers<[1], [0], [0], [1], [0, 0, 1, 1], [], []>} : vector<64x16xf32>, vector<16x32xf32>, vector<64x32xf32> -> vector<64x32xf32>
    %36 = arith.mulf %35, %4 : vector<64x32xf32>
    "tpu.trace_start"() <{level = 10 : i32, message = "rc,jc->rj"}> : () -> ()
    %cst_27 = arith.constant dense<0.000000e+00> : vector<16x64xf32>
    %37 = tpu.matmul %31, %34, %cst_27 {dimension_numbers = #tpu.dot_dimension_numbers<[1], [1], [0], [0], [0, 0, 1, 0], [], []>} : vector<16x32xf32>, vector<64x32xf32>, vector<16x64xf32> -> vector<16x64xf32>
    "tpu.trace_stop"() : () -> ()
    %cst_28 = arith.constant 0.353553385 : f32
    %38 = vector.broadcast %cst_28 : f32 to vector<16x64xf32>
    %39 = arith.mulf %37, %38 : vector<16x64xf32>
    %40 = arith.addf %39, %6 : vector<16x64xf32>
    %cst_29 = arith.constant dense<0xFF800000> : vector<16xf32>
    %41 = vector.multi_reduction <maximumf>, %40, %cst_29 [1] : vector<16x64xf32> to vector<16xf32>
    %42 = vector.shape_cast %41 : vector<16xf32> to vector<16x1xf32>
    %43 = vector.broadcast %42 : vector<16x1xf32> to vector<16x64xf32>
    %44 = arith.subf %40, %43 : vector<16x64xf32>
    %45 = math.exp %44 : vector<16x64xf32>
    %cst_30 = arith.constant dense<0.000000e+00> : vector<16x64xf32>
    %46 = tpu.matmul %45, %5, %cst_30 {dimension_numbers = #tpu.dot_dimension_numbers<[1], [0], [0], [1], [0, 0, 1, 1], [], []>} : vector<16x64xf32>, vector<64x64xf32>, vector<16x64xf32> -> vector<16x64xf32>
    %cst_31 = arith.constant 1.000000e-30 : f32
    %47 = vector.broadcast %cst_31 : f32 to vector<16x64xf32>
    %48 = arith.maximumf %46, %47 : vector<16x64xf32>
    %49 = tpu.reciprocal %48 {approx = true} : vector<16x64xf32> -> vector<16x64xf32>
    %50 = arith.mulf %45, %49 : vector<16x64xf32>
    %cst_32 = arith.constant dense<0.000000e+00> : vector<16x32xf32>
    %51 = tpu.matmul %50, %36, %cst_32 {dimension_numbers = #tpu.dot_dimension_numbers<[1], [0], [0], [1], [0, 0, 1, 1], [], []>} : vector<16x64xf32>, vector<64x32xf32>, vector<16x32xf32> -> vector<16x32xf32>
    %c0_33 = arith.constant 0 : index
    %c0_34 = arith.constant 0 : index
    %c0_35 = arith.constant 0 : index
    %52 = vector.load %arg11[%c0_33, %c0_34, %c0_35] : memref<2x32x32xf32, #tpu.memory_space<vmem>>, vector<1x32x32xf32>
    %53 = vector.shape_cast %52 : vector<1x32x32xf32> to vector<32x32xf32>
    %cst_36 = arith.constant dense<0.000000e+00> : vector<16x32xf32>
    %54 = tpu.matmul %51, %53, %cst_36 {dimension_numbers = #tpu.dot_dimension_numbers<[1], [0], [0], [1], [0, 0, 1, 1], [], []>} : vector<16x32xf32>, vector<32x32xf32>, vector<16x32xf32> -> vector<16x32xf32>
    %55 = arith.addf %0, %54 : vector<16x32xf32>
    %c0_37 = arith.constant 0 : index
    %c0_38 = arith.constant 0 : index
    %c0_39 = arith.constant 0 : index
    %56 = vector.load %arg12[%c0_37, %c0_38, %c0_39] : memref<2x1x32xf32, #tpu.memory_space<vmem>>, vector<1x1x32xf32>
    %57 = vector.shape_cast %56 : vector<1x1x32xf32> to vector<1x32xf32>
    %58 = arith.mulf %55, %55 : vector<16x32xf32>
    %cst_40 = arith.constant dense<0.000000e+00> : vector<16xf32>
    %59 = vector.multi_reduction <add>, %58, %cst_40 [1] : vector<16x32xf32> to vector<16xf32>
    %60 = vector.shape_cast %59 : vector<16xf32> to vector<16x1xf32>
    %cst_41 = arith.constant 3.200000e+01 : f32
    %61 = vector.broadcast %cst_41 : f32 to vector<16x1xf32>
    %62 = arith.divf %60, %61 : vector<16x1xf32>
    %cst_42 = arith.constant 9.99999997E-7 : f32
    %63 = vector.broadcast %cst_42 : f32 to vector<16x1xf32>
    %64 = arith.addf %62, %63 : vector<16x1xf32>
    %65 = math.rsqrt %64 : vector<16x1xf32>
    %66 = vector.broadcast %65 : vector<16x1xf32> to vector<16x32xf32>
    %67 = arith.mulf %55, %66 : vector<16x32xf32>
    %68 = vector.broadcast %57 : vector<1x32xf32> to vector<16x32xf32>
    %69 = arith.mulf %67, %68 : vector<16x32xf32>
    %c0_43 = arith.constant 0 : index
    %c0_44 = arith.constant 0 : index
    %c0_45 = arith.constant 0 : index
    %70 = vector.load %arg13[%c0_43, %c0_44, %c0_45] : memref<2x32x64xf32, #tpu.memory_space<vmem>>, vector<1x32x64xf32>
    %71 = vector.shape_cast %70 : vector<1x32x64xf32> to vector<32x64xf32>
    %cst_46 = arith.constant dense<0.000000e+00> : vector<16x64xf32>
    %72 = tpu.matmul %69, %71, %cst_46 {dimension_numbers = #tpu.dot_dimension_numbers<[1], [0], [0], [1], [0, 0, 1, 1], [], []>} : vector<16x32xf32>, vector<32x64xf32>, vector<16x64xf32> -> vector<16x64xf32>
    %73 = vector.extract_strided_slice %72 {offsets = [0, 0], sizes = [16, 32], strides = [1, 1]} : vector<16x64xf32> to vector<16x32xf32>
    %74 = vector.extract_strided_slice %72 {offsets = [0, 32], sizes = [16, 32], strides = [1, 1]} : vector<16x64xf32> to vector<16x32xf32>
    %75 = arith.negf %74 : vector<16x32xf32>
    %76 = math.exp %75 : vector<16x32xf32>
    %cst_47 = arith.constant 1.000000e+00 : f32
    %77 = vector.broadcast %cst_47 : f32 to vector<16x32xf32>
    %78 = arith.addf %77, %76 : vector<16x32xf32>
    %79 = arith.divf %77, %78 : vector<16x32xf32>
    %80 = arith.mulf %74, %79 : vector<16x32xf32>
    %81 = arith.mulf %73, %80 : vector<16x32xf32>
    %c0_48 = arith.constant 0 : index
    %c0_49 = arith.constant 0 : index
    %c0_50 = arith.constant 0 : index
    %82 = vector.load %arg14[%c0_48, %c0_49, %c0_50] : memref<2x32x32xf32, #tpu.memory_space<vmem>>, vector<1x32x32xf32>
    %83 = vector.shape_cast %82 : vector<1x32x32xf32> to vector<32x32xf32>
    %cst_51 = arith.constant dense<0.000000e+00> : vector<16x32xf32>
    %84 = tpu.matmul %81, %83, %cst_51 {dimension_numbers = #tpu.dot_dimension_numbers<[1], [0], [0], [1], [0, 0, 1, 1], [], []>} : vector<16x32xf32>, vector<32x32xf32>, vector<16x32xf32> -> vector<16x32xf32>
    %85 = arith.addf %55, %84 : vector<16x32xf32>
    %c1 = arith.constant 1 : index
    %c0_52 = arith.constant 0 : index
    %c0_53 = arith.constant 0 : index
    %86 = vector.load %arg9[%c1, %c0_52, %c0_53] : memref<2x1x32xf32, #tpu.memory_space<vmem>>, vector<1x1x32xf32>
    %87 = vector.shape_cast %86 : vector<1x1x32xf32> to vector<1x32xf32>
    %88 = arith.mulf %85, %85 : vector<16x32xf32>
    %cst_54 = arith.constant dense<0.000000e+00> : vector<16xf32>
    %89 = vector.multi_reduction <add>, %88, %cst_54 [1] : vector<16x32xf32> to vector<16xf32>
    %90 = vector.shape_cast %89 : vector<16xf32> to vector<16x1xf32>
    %cst_55 = arith.constant 3.200000e+01 : f32
    %91 = vector.broadcast %cst_55 : f32 to vector<16x1xf32>
    %92 = arith.divf %90, %91 : vector<16x1xf32>
    %cst_56 = arith.constant 9.99999997E-7 : f32
    %93 = vector.broadcast %cst_56 : f32 to vector<16x1xf32>
    %94 = arith.addf %92, %93 : vector<16x1xf32>
    %95 = math.rsqrt %94 : vector<16x1xf32>
    %96 = vector.broadcast %95 : vector<16x1xf32> to vector<16x32xf32>
    %97 = arith.mulf %85, %96 : vector<16x32xf32>
    %98 = vector.broadcast %87 : vector<1x32xf32> to vector<16x32xf32>
    %99 = arith.mulf %97, %98 : vector<16x32xf32>
    %c1_57 = arith.constant 1 : index
    %c0_58 = arith.constant 0 : index
    %c0_59 = arith.constant 0 : index
    %100 = vector.load %arg10[%c1_57, %c0_58, %c0_59] : memref<2x32x96xf32, #tpu.memory_space<vmem>>, vector<1x32x96xf32>
    %101 = vector.shape_cast %100 : vector<1x32x96xf32> to vector<32x96xf32>
    %cst_60 = arith.constant dense<0.000000e+00> : vector<16x96xf32>
    %102 = tpu.matmul %99, %101, %cst_60 {dimension_numbers = #tpu.dot_dimension_numbers<[1], [0], [0], [1], [0, 0, 1, 1], [], []>} : vector<16x32xf32>, vector<32x96xf32>, vector<16x96xf32> -> vector<16x96xf32>
    %103 = vector.extract_strided_slice %102 {offsets = [0, 0], sizes = [16, 64], strides = [1, 1]} : vector<16x96xf32> to vector<16x64xf32>
    %104 = vector.extract_strided_slice %102 {offsets = [0, 64], sizes = [16, 32], strides = [1, 1]} : vector<16x96xf32> to vector<16x32xf32>
    %105 = arith.mulf %103, %1 : vector<16x64xf32>
    %cst_61 = arith.constant dense<0.000000e+00> : vector<16x64xf32>
    %106 = tpu.matmul %103, %7, %cst_61 {dimension_numbers = #tpu.dot_dimension_numbers<[1], [0], [0], [1], [0, 0, 1, 1], [], []>} : vector<16x64xf32>, vector<64x64xf32>, vector<16x64xf32> -> vector<16x64xf32>
    %107 = arith.mulf %106, %2 : vector<16x64xf32>
    %108 = arith.addf %105, %107 : vector<16x64xf32>
    %109 = vector.extract_strided_slice %108 {offsets = [0, 0], sizes = [16, 32], strides = [1, 1]} : vector<16x64xf32> to vector<16x32xf32>
    %110 = vector.extract_strided_slice %108 {offsets = [0, 32], sizes = [16, 32], strides = [1, 1]} : vector<16x64xf32> to vector<16x32xf32>
    %cst_62 = arith.constant dense<0.000000e+00> : vector<64x32xf32>
    %111 = tpu.matmul %3, %110, %cst_62 {dimension_numbers = #tpu.dot_dimension_numbers<[1], [0], [0], [1], [0, 0, 1, 1], [], []>} : vector<64x16xf32>, vector<16x32xf32>, vector<64x32xf32> -> vector<64x32xf32>
    %112 = arith.mulf %111, %4 : vector<64x32xf32>
    %cst_63 = arith.constant dense<0.000000e+00> : vector<64x32xf32>
    %113 = tpu.matmul %3, %104, %cst_63 {dimension_numbers = #tpu.dot_dimension_numbers<[1], [0], [0], [1], [0, 0, 1, 1], [], []>} : vector<64x16xf32>, vector<16x32xf32>, vector<64x32xf32> -> vector<64x32xf32>
    %114 = arith.mulf %113, %4 : vector<64x32xf32>
    "tpu.trace_start"() <{level = 10 : i32, message = "rc,jc->rj"}> : () -> ()
    %cst_64 = arith.constant dense<0.000000e+00> : vector<16x64xf32>
    %115 = tpu.matmul %109, %112, %cst_64 {dimension_numbers = #tpu.dot_dimension_numbers<[1], [1], [0], [0], [0, 0, 1, 0], [], []>} : vector<16x32xf32>, vector<64x32xf32>, vector<16x64xf32> -> vector<16x64xf32>
    "tpu.trace_stop"() : () -> ()
    %cst_65 = arith.constant 0.353553385 : f32
    %116 = vector.broadcast %cst_65 : f32 to vector<16x64xf32>
    %117 = arith.mulf %115, %116 : vector<16x64xf32>
    %118 = arith.addf %117, %6 : vector<16x64xf32>
    %cst_66 = arith.constant dense<0xFF800000> : vector<16xf32>
    %119 = vector.multi_reduction <maximumf>, %118, %cst_66 [1] : vector<16x64xf32> to vector<16xf32>
    %120 = vector.shape_cast %119 : vector<16xf32> to vector<16x1xf32>
    %121 = vector.broadcast %120 : vector<16x1xf32> to vector<16x64xf32>
    %122 = arith.subf %118, %121 : vector<16x64xf32>
    %123 = math.exp %122 : vector<16x64xf32>
    %cst_67 = arith.constant dense<0.000000e+00> : vector<16x64xf32>
    %124 = tpu.matmul %123, %5, %cst_67 {dimension_numbers = #tpu.dot_dimension_numbers<[1], [0], [0], [1], [0, 0, 1, 1], [], []>} : vector<16x64xf32>, vector<64x64xf32>, vector<16x64xf32> -> vector<16x64xf32>
    %cst_68 = arith.constant 1.000000e-30 : f32
    %125 = vector.broadcast %cst_68 : f32 to vector<16x64xf32>
    %126 = arith.maximumf %124, %125 : vector<16x64xf32>
    %127 = tpu.reciprocal %126 {approx = true} : vector<16x64xf32> -> vector<16x64xf32>
    %128 = arith.mulf %123, %127 : vector<16x64xf32>
    %cst_69 = arith.constant dense<0.000000e+00> : vector<16x32xf32>
    %129 = tpu.matmul %128, %114, %cst_69 {dimension_numbers = #tpu.dot_dimension_numbers<[1], [0], [0], [1], [0, 0, 1, 1], [], []>} : vector<16x64xf32>, vector<64x32xf32>, vector<16x32xf32> -> vector<16x32xf32>
    %c1_70 = arith.constant 1 : index
    %c0_71 = arith.constant 0 : index
    %c0_72 = arith.constant 0 : index
    %130 = vector.load %arg11[%c1_70, %c0_71, %c0_72] : memref<2x32x32xf32, #tpu.memory_space<vmem>>, vector<1x32x32xf32>
    %131 = vector.shape_cast %130 : vector<1x32x32xf32> to vector<32x32xf32>
    %cst_73 = arith.constant dense<0.000000e+00> : vector<16x32xf32>
    %132 = tpu.matmul %129, %131, %cst_73 {dimension_numbers = #tpu.dot_dimension_numbers<[1], [0], [0], [1], [0, 0, 1, 1], [], []>} : vector<16x32xf32>, vector<32x32xf32>, vector<16x32xf32> -> vector<16x32xf32>
    %133 = arith.addf %85, %132 : vector<16x32xf32>
    %c1_74 = arith.constant 1 : index
    %c0_75 = arith.constant 0 : index
    %c0_76 = arith.constant 0 : index
    %134 = vector.load %arg12[%c1_74, %c0_75, %c0_76] : memref<2x1x32xf32, #tpu.memory_space<vmem>>, vector<1x1x32xf32>
    %135 = vector.shape_cast %134 : vector<1x1x32xf32> to vector<1x32xf32>
    %136 = arith.mulf %133, %133 : vector<16x32xf32>
    %cst_77 = arith.constant dense<0.000000e+00> : vector<16xf32>
    %137 = vector.multi_reduction <add>, %136, %cst_77 [1] : vector<16x32xf32> to vector<16xf32>
    %138 = vector.shape_cast %137 : vector<16xf32> to vector<16x1xf32>
    %cst_78 = arith.constant 3.200000e+01 : f32
    %139 = vector.broadcast %cst_78 : f32 to vector<16x1xf32>
    %140 = arith.divf %138, %139 : vector<16x1xf32>
    %cst_79 = arith.constant 9.99999997E-7 : f32
    %141 = vector.broadcast %cst_79 : f32 to vector<16x1xf32>
    %142 = arith.addf %140, %141 : vector<16x1xf32>
    %143 = math.rsqrt %142 : vector<16x1xf32>
    %144 = vector.broadcast %143 : vector<16x1xf32> to vector<16x32xf32>
    %145 = arith.mulf %133, %144 : vector<16x32xf32>
    %146 = vector.broadcast %135 : vector<1x32xf32> to vector<16x32xf32>
    %147 = arith.mulf %145, %146 : vector<16x32xf32>
    %c1_80 = arith.constant 1 : index
    %c0_81 = arith.constant 0 : index
    %c0_82 = arith.constant 0 : index
    %148 = vector.load %arg13[%c1_80, %c0_81, %c0_82] : memref<2x32x64xf32, #tpu.memory_space<vmem>>, vector<1x32x64xf32>
    %149 = vector.shape_cast %148 : vector<1x32x64xf32> to vector<32x64xf32>
    %cst_83 = arith.constant dense<0.000000e+00> : vector<16x64xf32>
    %150 = tpu.matmul %147, %149, %cst_83 {dimension_numbers = #tpu.dot_dimension_numbers<[1], [0], [0], [1], [0, 0, 1, 1], [], []>} : vector<16x32xf32>, vector<32x64xf32>, vector<16x64xf32> -> vector<16x64xf32>
    %151 = vector.extract_strided_slice %150 {offsets = [0, 0], sizes = [16, 32], strides = [1, 1]} : vector<16x64xf32> to vector<16x32xf32>
    %152 = vector.extract_strided_slice %150 {offsets = [0, 32], sizes = [16, 32], strides = [1, 1]} : vector<16x64xf32> to vector<16x32xf32>
    %153 = arith.negf %152 : vector<16x32xf32>
    %154 = math.exp %153 : vector<16x32xf32>
    %cst_84 = arith.constant 1.000000e+00 : f32
    %155 = vector.broadcast %cst_84 : f32 to vector<16x32xf32>
    %156 = arith.addf %155, %154 : vector<16x32xf32>
    %157 = arith.divf %155, %156 : vector<16x32xf32>
    %158 = arith.mulf %152, %157 : vector<16x32xf32>
    %159 = arith.mulf %151, %158 : vector<16x32xf32>
    %c1_85 = arith.constant 1 : index
    %c0_86 = arith.constant 0 : index
    %c0_87 = arith.constant 0 : index
    %160 = vector.load %arg14[%c1_85, %c0_86, %c0_87] : memref<2x32x32xf32, #tpu.memory_space<vmem>>, vector<1x32x32xf32>
    %161 = vector.shape_cast %160 : vector<1x32x32xf32> to vector<32x32xf32>
    %cst_88 = arith.constant dense<0.000000e+00> : vector<16x32xf32>
    %162 = tpu.matmul %159, %161, %cst_88 {dimension_numbers = #tpu.dot_dimension_numbers<[1], [0], [0], [1], [0, 0, 1, 1], [], []>} : vector<16x32xf32>, vector<32x32xf32>, vector<16x32xf32> -> vector<16x32xf32>
    %163 = arith.addf %133, %162 : vector<16x32xf32>
    %c0_89 = arith.constant 0 : index
    %c0_90 = arith.constant 0 : index
    %164 = vector.load %arg8[%c0_89, %c0_90] : memref<2x16xf32, #tpu.memory_space<vmem>>, vector<2x16xf32>
    %cst_91 = arith.constant dense<0.000000e+00> : vector<2x32xf32>
    %165 = tpu.matmul %164, %163, %cst_91 {dimension_numbers = #tpu.dot_dimension_numbers<[1], [0], [0], [1], [0, 0, 1, 1], [], []>} : vector<2x16xf32>, vector<16x32xf32>, vector<2x32xf32> -> vector<2x32xf32>
    %c0_92 = arith.constant 0 : index
    %c0_93 = arith.constant 0 : index
    %166 = vector.load %arg15[%c0_92, %c0_93] : memref<1x32xf32, #tpu.memory_space<vmem>>, vector<1x32xf32>
    %167 = arith.mulf %165, %165 : vector<2x32xf32>
    %cst_94 = arith.constant dense<0.000000e+00> : vector<2xf32>
    %168 = vector.multi_reduction <add>, %167, %cst_94 [1] : vector<2x32xf32> to vector<2xf32>
    %169 = vector.shape_cast %168 : vector<2xf32> to vector<2x1xf32>
    %cst_95 = arith.constant 3.200000e+01 : f32
    %170 = vector.broadcast %cst_95 : f32 to vector<2x1xf32>
    %171 = arith.divf %169, %170 : vector<2x1xf32>
    %cst_96 = arith.constant 9.99999997E-7 : f32
    %172 = vector.broadcast %cst_96 : f32 to vector<2x1xf32>
    %173 = arith.addf %171, %172 : vector<2x1xf32>
    %174 = math.rsqrt %173 : vector<2x1xf32>
    %175 = vector.broadcast %174 : vector<2x1xf32> to vector<2x32xf32>
    %176 = arith.mulf %165, %175 : vector<2x32xf32>
    %177 = vector.broadcast %166 : vector<1x32xf32> to vector<2x32xf32>
    %178 = arith.mulf %176, %177 : vector<2x32xf32>
    %c0_97 = arith.constant 0 : index
    %c0_98 = arith.constant 0 : index
    %179 = vector.load %arg16[%c0_97, %c0_98] : memref<32x256xf32, #tpu.memory_space<vmem>>, vector<32x256xf32>
    %cst_99 = arith.constant dense<0.000000e+00> : vector<2x256xf32>
    %180 = tpu.matmul %178, %179, %cst_99 {dimension_numbers = #tpu.dot_dimension_numbers<[1], [0], [0], [1], [0, 0, 1, 1], [], []>} : vector<2x32xf32>, vector<32x256xf32>, vector<2x256xf32> -> vector<2x256xf32>
    %c0_100 = arith.constant 0 : index
    %c0_101 = arith.constant 0 : index
    %181 = vector.load %arg17[%c0_100, %c0_101] : memref<1x256xf32, #tpu.memory_space<vmem>>, vector<1x256xf32>
    %182 = vector.broadcast %181 : vector<1x256xf32> to vector<2x256xf32>
    %183 = arith.addf %180, %182 : vector<2x256xf32>
    %c0_102 = arith.constant 0 : index
    %c0_103 = arith.constant 0 : index
    %184 = vector.load %arg18[%c0_102, %c0_103] : memref<2x256xf32, #tpu.memory_space<vmem>>, vector<2x256xf32>
    tpu.vector_store %arg18[%c0_102, %c0_103], %183 {strides = array<i32>} : memref<2x256xf32, #tpu.memory_space<vmem>>, vector<2x256xf32>,
    return
  }
}

</mosaic_0001>

<llo_original>
// kernel: tpu_custom_call.1
$region0: #{tpu_custom_call.1}
  #allocation0 [shape = 'u32[]', space=smem, size = 0x4, offset = 0x4, fixed_abs, tag = 'smem constant byte address 0x4 - core index']
  #allocation1 [shape = 'u32[144,128]{1,0:T(1,128)}', space=vmem, size = 0x12000, scoped, tag = 'internal scratch']
  %s0 = inlined_call_operand.hbm [shape: f32[16,32], index: 0, kind: input, shape index: {}]
  %s1 = inlined_call_operand.hbm [shape: f32[16,64], index: 1, kind: input, shape index: {}]
  %s2 = inlined_call_operand.hbm [shape: f32[16,64], index: 2, kind: input, shape index: {}]
  %s3 = inlined_call_operand.vmem [shape: f32[64,64], index: 3, kind: input, shape index: {}]
  %s4 = inlined_call_operand.vmem [shape: f32[64,16], index: 4, kind: input, shape index: {}]
  %s5 = inlined_call_operand.vmem [shape: f32[64,32], index: 5, kind: input, shape index: {}]
  %s6 = inlined_call_operand.vmem [shape: f32[64,64], index: 6, kind: input, shape index: {}]
  %s7 = inlined_call_operand.hbm [shape: f32[16,64], index: 7, kind: input, shape index: {}]
  %s8 = inlined_call_operand.vmem [shape: f32[2,16], index: 8, kind: input, shape index: {}]
  %s9 = inlined_call_operand.vmem [shape: f32[2,1,32], index: 9, kind: input, shape index: {}]
  %s10 = inlined_call_operand.vmem [shape: f32[2,32,96], index: 10, kind: input, shape index: {}]
  %s11 = inlined_call_operand.hbm [shape: f32[2,32,32], index: 11, kind: input, shape index: {}]
  %s12 = inlined_call_operand.vmem [shape: f32[2,1,32], index: 12, kind: input, shape index: {}]
  %s13 = inlined_call_operand.hbm [shape: f32[2,32,64], index: 13, kind: input, shape index: {}]
  %s14 = inlined_call_operand.hbm [shape: f32[2,32,32], index: 14, kind: input, shape index: {}]
  %s15 = inlined_call_operand.vmem [shape: f32[1,32], index: 15, kind: input, shape index: {}]
  %s16 = inlined_call_operand.hbm [shape: f32[32,256], index: 16, kind: input, shape index: {}]
  %s17 = inlined_call_operand.vmem [shape: f32[1,256], index: 17, kind: input, shape index: {}]
  %s18 = inlined_call_operand.hbm [shape: f32[2,256], index: 18, kind: output, shape index: {}]
  %s19 = sld [smem:[#allocation0]]
  $region114: #{tpu_custom_call.1} parent=0
    _
  %s21 = ssub.s32 1, %s19
  %s22 = scalar_select 0, %s21, %s19
  $region1: #{tpu_custom_call.1} parent=0
    #allocation2 [shape = 'u8[8192]{0}', space=vmem, size = 0x2000, scoped, tag = 'input window, operand 0, single buffered']
    #allocation3 [shape = 's32[1]{0}', space=sflag, size = 0x4, scoped, tag = 'scoped memory for tpu_custom_call.1']
    #allocation4 [shape = 's32[1]{0}', space=sflag, size = 0x4, scoped, tag = 'scoped memory for tpu_custom_call.1']
    #allocation5 [shape = 'u8[8192]{0}', space=vmem, size = 0x2000, scoped, tag = 'input window, operand 1, single buffered']
    #allocation6 [shape = 's32[1]{0}', space=sflag, size = 0x4, scoped, tag = 'scoped memory for tpu_custom_call.1']
    #allocation7 [shape = 'u8[8192]{0}', space=vmem, size = 0x2000, scoped, tag = 'input window, operand 2, single buffered']
    #allocation8 [shape = 'u8[8192]{0}', space=vmem, size = 0x2000, scoped, tag = 'input window, operand 7, single buffered']
    #allocation9 [shape = 's32[1]{0}', space=sflag, size = 0x4, scoped, tag = 'scoped memory for tpu_custom_call.1']
    #allocation10 [shape = 'u8[32768]{0}', space=vmem, size = 0x8000, scoped, tag = 'input window, operand 11, single buffered']
    #allocation11 [shape = 'u8[32768]{0}', space=vmem, size = 0x8000, scoped, tag = 'input window, operand 13, single buffered']
    #allocation12 [shape = 's32[1]{0}', space=sflag, size = 0x4, scoped, tag = 'scoped memory for tpu_custom_call.1']
    #allocation13 [shape = 'u8[32768]{0}', space=vmem, size = 0x8000, scoped, tag = 'input window, operand 14, single buffered']
    #allocation14 [shape = 'u8[32768]{0}', space=vmem, size = 0x8000, scoped, tag = 'input window, operand 16, single buffered']
    #allocation15 [shape = 's32[1]{0}', space=sflag, size = 0x4, scoped, tag = 'scoped memory for tpu_custom_call.1']
    #allocation16 [shape = 'u8[2048]{0}', space=vmem, size = 0x800, scoped, tag = 'output window, operand 0, single buffered']
    %23 = vsyncpa [#allocation3], 0
    %24 = vsyncpa [#allocation6], 0
    %25 = vsyncpa [#allocation9], 0
    %26 = vsyncpa [#allocation12], 0
    %27 = vsyncpa [#allocation15], 0
    %28 = vsyncpa [#allocation4], 0
    // Predicated region
    $region2: #{tpu_custom_call.1} parent=1 // pred_check
      _
    $region3: #{tpu_custom_call.1} parent=1 // pred_check_branch
      %30 = sbr.rel (0) target = $region5
    $region4: #{tpu_custom_call.1} parent=1 // pred_region
      %s32 = ssub.s32 256, 256
      %33 = vsyncadd [#allocation3], %s32
      %s34 = sshll.u32 [#allocation2], 4
      %s35 = int_to_ptr.vmem [resolvable:$true] %s34
      %40 = dma.hbm_to_vmem [thread:$0]  %s0, 256, %s35, [#allocation3], 128, 128, 8
    $region5: #{tpu_custom_call.1} parent=1 // pred_fallthru
      _
    // Predicated region
    $region6: #{tpu_custom_call.1} parent=1 // pred_check
      _
    $region7: #{tpu_custom_call.1} parent=1 // pred_check_branch
      %42 = sbr.rel (0) target = $region9
    $region8: #{tpu_custom_call.1} parent=1 // pred_region
      %s44 = ssub.s32 256, 256
      %45 = vsyncadd [#allocation6], %s44
      %s46 = sshll.u32 [#allocation5], 4
      %s47 = int_to_ptr.vmem [resolvable:$true] %s46
      %52 = dma.hbm_to_vmem [thread:$0]  %s1, 256, %s47, [#allocation6], 128, 128, 8
    $region9: #{tpu_custom_call.1} parent=1 // pred_fallthru
      _
    // Predicated region
    $region10: #{tpu_custom_call.1} parent=1 // pred_check
      _
    $region11: #{tpu_custom_call.1} parent=1 // pred_check_branch
      %54 = sbr.rel (0) target = $region13
    $region12: #{tpu_custom_call.1} parent=1 // pred_region
      %s56 = ssub.s32 256, 256
      %57 = vsyncadd [#allocation6], %s56
      %s58 = sshll.u32 [#allocation7], 4
      %s59 = int_to_ptr.vmem [resolvable:$true] %s58
      %64 = dma.hbm_to_vmem [thread:$0]  %s2, 256, %s59, [#allocation6], 128, 128, 8
    $region13: #{tpu_custom_call.1} parent=1 // pred_fallthru
      _
    // Predicated region
    $region14: #{tpu_custom_call.1} parent=1 // pred_check
      _
    $region15: #{tpu_custom_call.1} parent=1 // pred_check_branch
      %66 = sbr.rel (0) target = $region17
    $region16: #{tpu_custom_call.1} parent=1 // pred_region
      _
    $region17: #{tpu_custom_call.1} parent=1 // pred_fallthru
      _
    // Predicated region
    $region18: #{tpu_custom_call.1} parent=1 // pred_check
      _
    $region19: #{tpu_custom_call.1} parent=1 // pred_check_branch
      %68 = sbr.rel (0) target = $region21
    $region20: #{tpu_custom_call.1} parent=1 // pred_region
      _
    $region21: #{tpu_custom_call.1} parent=1 // pred_fallthru
      _
    // Predicated region
    $region22: #{tpu_custom_call.1} parent=1 // pred_check
      _
    $region23: #{tpu_custom_call.1} parent=1 // pred_check_branch
      %70 = sbr.rel (0) target = $region25
    $region24: #{tpu_custom_call.1} parent=1 // pred_region
      _
    $region25: #{tpu_custom_call.1} parent=1 // pred_fallthru
      _
    // Predicated region
    $region26: #{tpu_custom_call.1} parent=1 // pred_check
      _
    $region27: #{tpu_custom_call.1} parent=1 // pred_check_branch
      %72 = sbr.rel (0) target = $region29
    $region28: #{tpu_custom_call.1} parent=1 // pred_region
      _
    $region29: #{tpu_custom_call.1} parent=1 // pred_fallthru
      _
    // Predicated region
    $region30: #{tpu_custom_call.1} parent=1 // pred_check
      _
    $region31: #{tpu_custom_call.1} parent=1 // pred_check_branch
      %74 = sbr.rel (0) target = $region33
    $region32: #{tpu_custom_call.1} parent=1 // pred_region
      %s76 = ssub.s32 256, 256
      %77 = vsyncadd [#allocation9], %s76
      %s78 = sshll.u32 [#allocation8], 4
      %s79 = int_to_ptr.vmem [resolvable:$true] %s78
      %84 = dma.hbm_to_vmem [thread:$0]  %s7, 256, %s79, [#allocation9], 128, 128, 8
    $region33: #{tpu_custom_call.1} parent=1 // pred_fallthru
      _
    // Predicated region
    $region34: #{tpu_custom_call.1} parent=1 // pred_check
      _
    $region35: #{tpu_custom_call.1} parent=1 // pred_check_branch
      %86 = sbr.rel (0) target = $region37
    $region36: #{tpu_custom_call.1} parent=1 // pred_region
      _
    $region37: #{tpu_custom_call.1} parent=1 // pred_fallthru
      _
    // Predicated region
    $region38: #{tpu_custom_call.1} parent=1 // pred_check
      _
    $region39: #{tpu_custom_call.1} parent=1 // pred_check_branch
      %88 = sbr.rel (0) target = $region41
    $region40: #{tpu_custom_call.1} parent=1 // pred_region
      _
    $region41: #{tpu_custom_call.1} parent=1 // pred_fallthru
      _
    // Predicated region
    $region42: #{tpu_custom_call.1} parent=1 // pred_check
      _
    $region43: #{tpu_custom_call.1} parent=1 // pred_check_branch
      %90 = sbr.rel (0) target = $region45
    $region44: #{tpu_custom_call.1} parent=1 // pred_region
      _
    $region45: #{tpu_custom_call.1} parent=1 // pred_fallthru
      _
    // Predicated region
    $region46: #{tpu_custom_call.1} parent=1 // pred_check
      _
    $region47: #{tpu_custom_call.1} parent=1 // pred_check_branch
      %92 = sbr.rel (0) target = $region49
    $region48: #{tpu_custom_call.1} parent=1 // pred_region
      %s94 = ssub.s32 1024, 1024
      %95 = vsyncadd [#allocation9], %s94
      %s96 = sshll.u32 [#allocation10], 4
      %s97 = int_to_ptr.vmem [resolvable:$true] %s96
      %102 = dma.hbm_to_vmem [thread:$0]  %s11, 1024, %s97, [#allocation9], 128, 128, 8
    $region49: #{tpu_custom_call.1} parent=1 // pred_fallthru
      _
    // Predicated region
    $region50: #{tpu_custom_call.1} parent=1 // pred_check
      _
    $region51: #{tpu_custom_call.1} parent=1 // pred_check_branch
      %104 = sbr.rel (0) target = $region53
    $region52: #{tpu_custom_call.1} parent=1 // pred_region
      _
    $region53: #{tpu_custom_call.1} parent=1 // pred_fallthru
      _
    // Predicated region
    $region54: #{tpu_custom_call.1} parent=1 // pred_check
      _
    $region55: #{tpu_custom_call.1} parent=1 // pred_check_branch
      %106 = sbr.rel (0) target = $region57
    $region56: #{tpu_custom_call.1} parent=1 // pred_region
      %s108 = ssub.s32 1024, 1024
      %109 = vsyncadd [#allocation12], %s108
      %s110 = sshll.u32 [#allocation11], 4
      %s111 = int_to_ptr.vmem [resolvable:$true] %s110
      %116 = dma.hbm_to_vmem [thread:$0]  %s13, 1024, %s111, [#allocation12], 128, 128, 8
    $region57: #{tpu_custom_call.1} parent=1 // pred_fallthru
      _
    // Predicated region
    $region58: #{tpu_custom_call.1} parent=1 // pred_check
      _
    $region59: #{tpu_custom_call.1} parent=1 // pred_check_branch
      %118 = sbr.rel (0) target = $region61
    $region60: #{tpu_custom_call.1} parent=1 // pred_region
      %s120 = ssub.s32 1024, 1024
      %121 = vsyncadd [#allocation12], %s120
      %s122 = sshll.u32 [#allocation13], 4
      %s123 = int_to_ptr.vmem [resolvable:$true] %s122
      %128 = dma.hbm_to_vmem [thread:$0]  %s14, 1024, %s123, [#allocation12], 128, 128, 8
    $region61: #{tpu_custom_call.1} parent=1 // pred_fallthru
      _
    // Predicated region
    $region62: #{tpu_custom_call.1} parent=1 // pred_check
      _
    $region63: #{tpu_custom_call.1} parent=1 // pred_check_branch
      %130 = sbr.rel (0) target = $region65
    $region64: #{tpu_custom_call.1} parent=1 // pred_region
      _
    $region65: #{tpu_custom_call.1} parent=1 // pred_fallthru
      _
    // Predicated region
    $region66: #{tpu_custom_call.1} parent=1 // pred_check
      _
    $region67: #{tpu_custom_call.1} parent=1 // pred_check_branch
      %132 = sbr.rel (0) target = $region69
    $region68: #{tpu_custom_call.1} parent=1 // pred_region
      %s134 = ssub.s32 1024, 1024
      %135 = vsyncadd [#allocation15], %s134
      %s136 = sshll.u32 [#allocation14], 4
      %s137 = int_to_ptr.vmem [resolvable:$true] %s136
      %142 = dma.hbm_to_vmem [thread:$0]  %s16, 1024, %s137, [#allocation15], 256, 256, 16
    $region69: #{tpu_custom_call.1} parent=1 // pred_fallthru
      _
    // Predicated region
    $region70: #{tpu_custom_call.1} parent=1 // pred_check
      _
    $region71: #{tpu_custom_call.1} parent=1 // pred_check_branch
      %144 = sbr.rel (0) target = $region73
    $region72: #{tpu_custom_call.1} parent=1 // pred_region
      _
    $region73: #{tpu_custom_call.1} parent=1 // pred_fallthru
      _
    // Predicated region
    $region74: #{tpu_custom_call.1} parent=1 // pred_check
      _
    $region75: #{tpu_custom_call.1} parent=1 // pred_check_branch
      %146 = sbr.rel (0) target = $region77
    $region76: #{tpu_custom_call.1} parent=1 // pred_region
      %147 = dma.done [#allocation3], 256
    $region77: #{tpu_custom_call.1} parent=1 // pred_fallthru
      _
    // Predicated region
    $region78: #{tpu_custom_call.1} parent=1 // pred_check
      _
    $region79: #{tpu_custom_call.1} parent=1 // pred_check_branch
      %149 = sbr.rel (0) target = $region81
    $region80: #{tpu_custom_call.1} parent=1 // pred_region
      %150 = dma.done [#allocation6], 256
    $region81: #{tpu_custom_call.1} parent=1 // pred_fallthru
      _
    // Predicated region
    $region82: #{tpu_custom_call.1} parent=1 // pred_check
      _
    $region83: #{tpu_custom_call.1} parent=1 // pred_check_branch
      %152 = sbr.rel (0) target = $region85
    $region84: #{tpu_custom_call.1} parent=1 // pred_region
      %153 = dma.done [#allocation6], 256
    $region85: #{tpu_custom_call.1} parent=1 // pred_fallthru
      _
    // Predicated region
    $region86: #{tpu_custom_call.1} parent=1 // pred_check
      _
    $region87: #{tpu_custom_call.1} parent=1 // pred_check_branch
      %155 = sbr.rel (0) target = $region89
    $region88: #{tpu_custom_call.1} parent=1 // pred_region
      %156 = dma.done [#allocation9], 256
    $region89: #{tpu_custom_call.1} parent=1 // pred_fallthru
      _
    // Predicated region
    $region90: #{tpu_custom_call.1} parent=1 // pred_check
      _
    $region91: #{tpu_custom_call.1} parent=1 // pred_check_branch
      %158 = sbr.rel (0) target = $region93
    $region92: #{tpu_custom_call.1} parent=1 // pred_region
      %159 = dma.done [#allocation9], 1024
    $region93: #{tpu_custom_call.1} parent=1 // pred_fallthru
      _
    // Predicated region
    $region94: #{tpu_custom_call.1} parent=1 // pred_check
      _
    $region95: #{tpu_custom_call.1} parent=1 // pred_check_branch
      %161 = sbr.rel (0) target = $region97
    $region96: #{tpu_custom_call.1} parent=1 // pred_region
      %162 = dma.done [#allocation12], 1024
    $region97: #{tpu_custom_call.1} parent=1 // pred_fallthru
      _
    // Predicated region
    $region98: #{tpu_custom_call.1} parent=1 // pred_check
      _
    $region99: #{tpu_custom_call.1} parent=1 // pred_check_branch
      %164 = sbr.rel (0) target = $region101
    $region100: #{tpu_custom_call.1} parent=1 // pred_region
      %165 = dma.done [#allocation12], 1024
    $region101: #{tpu_custom_call.1} parent=1 // pred_fallthru
      _
    // Predicated region
    $region102: #{tpu_custom_call.1} parent=1 // pred_check
      _
    $region103: #{tpu_custom_call.1} parent=1 // pred_check_branch
      %167 = sbr.rel (0) target = $region105
    $region104: #{tpu_custom_call.1} parent=1 // pred_region
      %168 = dma.done [#allocation15], 1024
    $region105: #{tpu_custom_call.1} parent=1 // pred_fallthru
      _
    %v169 = vld [vmem:[#allocation2] sm:$0xff]
    %v170 = vld [vmem:[#allocation2 + $0x8] sm:$0xff]
    %v171 = vld [vmem:[#allocation5] sm:$0xff]
    %v172 = vld [vmem:[#allocation5 + $0x8] sm:$0xff]
    %v173 = vld [vmem:[#allocation7] sm:$0xff]
    %v174 = vld [vmem:[#allocation7 + $0x8] sm:$0xff]
    %v175 = vld [vmem:[%s4] sm:$0xff]
    %v176 = vld [vmem:[%s4 + $0x8] sm:$0xff]
    %v177 = vld [vmem:[%s4 + $0x10] sm:$0xff]
    %v178 = vld [vmem:[%s4 + $0x18] sm:$0xff]
    %v179 = vld [vmem:[%s4 + $0x20] sm:$0xff]
    %v180 = vld [vmem:[%s4 + $0x28] sm:$0xff]
    %v181 = vld [vmem:[%s4 + $0x30] sm:$0xff]
    %v182 = vld [vmem:[%s4 + $0x38] sm:$0xff]
    %v183 = vld [vmem:[%s5] sm:$0xff]
    %v184 = vld [vmem:[%s5 + $0x8] sm:$0xff]
    %v185 = vld [vmem:[%s5 + $0x10] sm:$0xff]
    %v186 = vld [vmem:[%s5 + $0x18] sm:$0xff]
    %v187 = vld [vmem:[%s5 + $0x20] sm:$0xff]
    %v188 = vld [vmem:[%s5 + $0x28] sm:$0xff]
    %v189 = vld [vmem:[%s5 + $0x30] sm:$0xff]
    %v190 = vld [vmem:[%s5 + $0x38] sm:$0xff]
    %v191 = vld [vmem:[%s6] sm:$0xff]
    %v192 = vld [vmem:[%s6 + $0x8] sm:$0xff]
    %v193 = vld [vmem:[%s6 + $0x10] sm:$0xff]
    %v194 = vld [vmem:[%s6 + $0x18] sm:$0xff]
    %v195 = vld [vmem:[%s6 + $0x20] sm:$0xff]
    %v196 = vld [vmem:[%s6 + $0x28] sm:$0xff]
    %v197 = vld [vmem:[%s6 + $0x30] sm:$0xff]
    %v198 = vld [vmem:[%s6 + $0x38] sm:$0xff]
    %v199 = vld [vmem:[#allocation8] sm:$0xff]
    %v200 = vld [vmem:[#allocation8 + $0x8] sm:$0xff]
    %v201 = vld [vmem:[%s3] sm:$0xff]
    %v202 = vld [vmem:[%s3 + $0x8] sm:$0xff]
    %v203 = vld [vmem:[%s3 + $0x10] sm:$0xff]
    %v204 = vld [vmem:[%s3 + $0x18] sm:$0xff]
    %v205 = vld [vmem:[%s3 + $0x20] sm:$0xff]
    %v206 = vld [vmem:[%s3 + $0x28] sm:$0xff]
    %v207 = vld [vmem:[%s3 + $0x30] sm:$0xff]
    %v208 = vld [vmem:[%s3 + $0x38] sm:$0xff]
    %v209 = vld [vmem:[%s9] sm:$0x1]
    %v210 = vmul.f32 %v169, %v169
    %v211 = vmul.f32 %v170, %v170
    %vm212 = vcmask 261120
    %v213 = vsel %vm212, %v210, 0.0
    %214 = vadd.xlane.f32.xlu0 %v213
    %v215 = vpop.xlane.xlu0 %214
    %v216 = vsel %vm212, %v211, 0.0
    %217 = vadd.xlane.f32.xlu0 %v216
    %v218 = vpop.xlane.xlu0 %217
    %v219 = vrcp.pop 32.0
    %v220 = vmul.f32 %v215, %v219
    %v221 = vmul.f32 %v218, %v219
    %v222 = vadd.f32 %v220, 1e-06
    %v223 = vadd.f32 %v221, 1e-06
    %v224 = vrsqrt.pop %v222
    %v225 = vrsqrt.pop %v223
    %v226 = vmul.f32 %v169, %v224
    %v227 = vmul.f32 %v170, %v225
    %v229 = vlaneseq
    %v230 = vshrl.u32 %v229, 7
    %v231 = vsub.s32 0, %v230
    %v232 = vrot.slane %v209, %v231
    %v234 = vmul.f32 %v226, %v232
    %v235 = vmul.f32 %v227, %v232
    %v236 = vld [vmem:[%s10] sm:$0xff]
    %v237 = vld [vmem:[%s10 + $0x8] sm:$0xff]
    %v238 = vld [vmem:[%s10 + $0x10] sm:$0xff]
    %v239 = vld [vmem:[%s10 + $0x18] sm:$0xff]
    %v241 = vsel %vm212, %v234, 0
    %v244 = vsel %vm212, %v235, 0
    %246 = vmatprep.subr.mxu0 0.0
    %247 = vmatpush1.msra.mxu0 %v236
    %248 = vmatprep.subr.mxu0 0.0
    %249 = vmatpush1.msra.mxu0 %v237
    %250 = vmatprep.subr.mxu0 0.0
    %251 = vmatpush1.msra.mxu0 %v238
    %252 = vmatprep.subr.mxu0 0.0
    %253 = vmatpush1.msra.mxu0 %v239
    %254 = vmatprep.subr.mxu0 0.0
    %255 = vmatpush1.msra.mxu0 0.0
    %256 = vmatprep.subr.mxu0 0.0
    %257 = vmatpush1.msra.mxu0 0.0
    %258 = vmatprep.subr.mxu0 0.0
    %259 = vmatpush1.msra.mxu0 0.0
    %260 = vmatprep.subr.mxu0 0.0
    %261 = vmatpush1.msra.mxu0 0.0
    %262 = vmatprep.subr.mxu0 0.0
    %263 = vmatpush1.msra.mxu0 0.0
    %264 = vmatprep.subr.mxu0 0.0
    %265 = vmatpush1.msra.mxu0 0.0
    %266 = vmatprep.subr.mxu0 0.0
    %267 = vmatpush1.msra.mxu0 0.0
    %268 = vmatprep.subr.mxu0 0.0
    %269 = vmatpush1.msra.mxu0 0.0
    %270 = vmatprep.subr.mxu0 0.0
    %271 = vmatpush1.msra.mxu0 0.0
    %272 = vmatprep.subr.mxu0 0.0
    %273 = vmatpush1.msra.mxu0 0.0
    %274 = vmatprep.subr.mxu0 0.0
    %275 = vmatpush1.msra.mxu0 0.0
    %276 = vmatprep.subr.mxu0 0.0
    %277 = vmatpush1.msra.mxu0 0.0
    %278 = vmatprep.subr.mxu0 0.0
    %279 = vmatpush1.msra.mxu0 0.0
    %280 = vmatprep.subr.mxu0 0.0
    %281 = vmatpush1.msra.mxu0 0.0
    %282 = vmatprep.subr.mxu0 0.0
    %283 = vmatpush1.msra.mxu0 0.0
    %284 = vmatprep.subr.mxu0 0.0
    %285 = vmatpush1.msra.mxu0 0.0
    %286 = vmatprep.subr.mxu0 0.0
    %287 = vmatpush1.msra.mxu0 0.0
    %288 = vmatprep.subr.mxu0 0.0
    %289 = vmatpush1.msra.mxu0 0.0
    %290 = vmatprep.subr.mxu0 0.0
    %291 = vmatpush1.msra.mxu0 0.0
    %292 = vmatprep.subr.mxu0 0.0
    %293 = vmatpush1.msra.mxu0 0.0
    %294 = vmatprep.subr.mxu0 0.0
    %295 = vmatpush1.msra.mxu0 0.0
    %296 = vmatprep.subr.mxu0 0.0
    %297 = vmatpush1.msra.mxu0 0.0
    %298 = vmatprep.subr.mxu0 0.0
    %299 = vmatpush1.msra.mxu0 0.0
    %300 = vmatprep.subr.mxu0 0.0
    %301 = vmatpush1.msra.mxu0 0.0
    %302 = vmatprep.subr.mxu0 0.0
    %303 = vmatpush1.msra.mxu0 0.0
    %304 = vmatprep.subr.mxu0 0.0
    %305 = vmatpush1.msra.mxu0 0.0
    %306 = vmatprep.subr.mxu0 0.0
    %307 = vmatpush1.msra.mxu0 0.0
    %308 = vmatprep.subr.mxu0 0.0
    %309 = vmatpush1.msra.mxu0 0.0
    %310 = vmatprep.mubr.f32.mxu0 0.0
    %311 = vmatmul.mubr.f32.gmra.mrb[0].mxu0 %v241
    %v312 = vpop.f32.mrb[0].mxu0
    %v313 = vadd.f32 0.0, %v312
    %v314 = vpop.f32.mrb[0].mxu0
    %315 = vmatprep.mubr.f32.mxu0 0.0
    %316 = vmatmul.mubr.f32.gmra.mrb[0].mxu0 %v244
    %v317 = vpop.f32.mrb[0].mxu0
    %v318 = vadd.f32 0.0, %v317
    %v319 = vpop.f32.mrb[0].mxu0
    %320 = vdwg.mxu0
    %v321 = vmul.f32 %v313, %v171
    %v322 = vmul.f32 %v318, %v172
    %vm323 = vcmask 523264
    %v325 = vsel %vm323, %v313, 0
    %v328 = vsel %vm323, %v318, 0
    %330 = vmatprep.subr.mxu0 0.0
    %331 = vmatpush1.msra.mxu0 %v201
    %332 = vmatprep.subr.mxu0 0.0
    %333 = vmatpush1.msra.mxu0 %v202
    %334 = vmatprep.subr.mxu0 0.0
    %335 = vmatpush1.msra.mxu0 %v203
    %336 = vmatprep.subr.mxu0 0.0
    %337 = vmatpush1.msra.mxu0 %v204
    %338 = vmatprep.subr.mxu0 0.0
    %339 = vmatpush1.msra.mxu0 %v205
    %340 = vmatprep.subr.mxu0 0.0
    %341 = vmatpush1.msra.mxu0 %v206
    %342 = vmatprep.subr.mxu0 0.0
    %343 = vmatpush1.msra.mxu0 %v207
    %344 = vmatprep.subr.mxu0 0.0
    %345 = vmatpush1.msra.mxu0 %v208
    %346 = vmatprep.subr.mxu0 0.0
    %347 = vmatpush1.msra.mxu0 0.0
    %348 = vmatprep.subr.mxu0 0.0
    %349 = vmatpush1.msra.mxu0 0.0
    %350 = vmatprep.subr.mxu0 0.0
    %351 = vmatpush1.msra.mxu0 0.0
    %352 = vmatprep.subr.mxu0 0.0
    %353 = vmatpush1.msra.mxu0 0.0
    %354 = vmatprep.subr.mxu0 0.0
    %355 = vmatpush1.msra.mxu0 0.0
    %356 = vmatprep.subr.mxu0 0.0
    %357 = vmatpush1.msra.mxu0 0.0
    %358 = vmatprep.subr.mxu0 0.0
    %359 = vmatpush1.msra.mxu0 0.0
    %360 = vmatprep.subr.mxu0 0.0
    %361 = vmatpush1.msra.mxu0 0.0
    %362 = vmatprep.subr.mxu0 0.0
    %363 = vmatpush1.msra.mxu0 0.0
    %364 = vmatprep.subr.mxu0 0.0
    %365 = vmatpush1.msra.mxu0 0.0
    %366 = vmatprep.subr.mxu0 0.0
    %367 = vmatpush1.msra.mxu0 0.0
    %368 = vmatprep.subr.mxu0 0.0
    %369 = vmatpush1.msra.mxu0 0.0
    %370 = vmatprep.subr.mxu0 0.0
    %371 = vmatpush1.msra.mxu0 0.0
    %372 = vmatprep.subr.mxu0 0.0
    %373 = vmatpush1.msra.mxu0 0.0
    %374 = vmatprep.subr.mxu0 0.0
    %375 = vmatpush1.msra.mxu0 0.0
    %376 = vmatprep.subr.mxu0 0.0
    %377 = vmatpush1.msra.mxu0 0.0
    %378 = vmatprep.subr.mxu0 0.0
    %379 = vmatpush1.msra.mxu0 0.0
    %380 = vmatprep.subr.mxu0 0.0
    %381 = vmatpush1.msra.mxu0 0.0
    %382 = vmatprep.subr.mxu0 0.0
    %383 = vmatpush1.msra.mxu0 0.0
    %384 = vmatprep.subr.mxu0 0.0
    %385 = vmatpush1.msra.mxu0 0.0
    %386 = vmatprep.subr.mxu0 0.0
    %387 = vmatpush1.msra.mxu0 0.0
    %388 = vmatprep.subr.mxu0 0.0
    %389 = vmatpush1.msra.mxu0 0.0
    %390 = vmatprep.subr.mxu0 0.0
    %391 = vmatpush1.msra.mxu0 0.0
    %392 = vmatprep.subr.mxu0 0.0
    %393 = vmatpush1.msra.mxu0 0.0
    %394 = vmatprep.mubr.f32.mxu0 0.0
    %395 = vmatmul.mubr.f32.gmra.mrb[0].mxu0 %v325
    %v396 = vpop.f32.mrb[0].mxu0
    %v397 = vadd.f32 0.0, %v396
    %v398 = vpop.f32.mrb[0].mxu0
    %399 = vmatprep.mubr.f32.mxu0 0.0
    %400 = vmatmul.mubr.f32.gmra.mrb[0].mxu0 %v328
    %v401 = vpop.f32.mrb[0].mxu0
    %v402 = vadd.f32 0.0, %v401
    %v403 = vpop.f32.mrb[0].mxu0
    %404 = vdwg.mxu0
    %v405 = vmul.f32 %v397, %v173
    %v406 = vmul.f32 %v402, %v174
    %v407 = vadd.f32 %v321, %v405
    %v408 = vadd.f32 %v322, %v406
    %411 = vrot.lane.b32.xlu0 %v407, 96
    %v412 = vpop.permute.xlu0 %411
    %413 = vrot.lane.b32.xlu0 %v408, 96
    %v414 = vpop.permute.xlu0 %413
    %vm417 = vcmask 130048
    %v419 = vsel %vm417, %v175, 0
    %v422 = vsel %vm417, %v176, 0
    %v425 = vsel %vm417, %v177, 0
    %v428 = vsel %vm417, %v178, 0
    %v431 = vsel %vm417, %v179, 0
    %v434 = vsel %vm417, %v180, 0
    %v437 = vsel %vm417, %v181, 0
    %v440 = vsel %vm417, %v182, 0
    %442 = vmatprep.subr.mxu0 0.0
    %443 = vmatpush1.msra.mxu0 %v412
    %444 = vmatprep.subr.mxu0 0.0
    %445 = vmatpush1.msra.mxu0 %v414
    %446 = vmatprep.subr.mxu0 0.0
    %447 = vmatpush1.msra.mxu0 0.0
    %448 = vmatprep.subr.mxu0 0.0
    %449 = vmatpush1.msra.mxu0 0.0
    %450 = vmatprep.subr.mxu0 0.0
    %451 = vmatpush1.msra.mxu0 0.0
    %452 = vmatprep.subr.mxu0 0.0
    %453 = vmatpush1.msra.mxu0 0.0
    %454 = vmatprep.subr.mxu0 0.0
    %455 = vmatpush1.msra.mxu0 0.0
    %456 = vmatprep.subr.mxu0 0.0
    %457 = vmatpush1.msra.mxu0 0.0
    %458 = vmatprep.subr.mxu0 0.0
    %459 = vmatpush1.msra.mxu0 0.0
    %460 = vmatprep.subr.mxu0 0.0
    %461 = vmatpush1.msra.mxu0 0.0
    %462 = vmatprep.subr.mxu0 0.0
    %463 = vmatpush1.msra.mxu0 0.0
    %464 = vmatprep.subr.mxu0 0.0
    %465 = vmatpush1.msra.mxu0 0.0
    %466 = vmatprep.subr.mxu0 0.0
    %467 = vmatpush1.msra.mxu0 0.0
    %468 = vmatprep.subr.mxu0 0.0
    %469 = vmatpush1.msra.mxu0 0.0
    %470 = vmatprep.subr.mxu0 0.0
    %471 = vmatpush1.msra.mxu0 0.0
    %472 = vmatprep.subr.mxu0 0.0
    %473 = vmatpush1.msra.mxu0 0.0
    %474 = vmatprep.subr.mxu0 0.0
    %475 = vmatpush1.msra.mxu0 0.0
    %476 = vmatprep.subr.mxu0 0.0
    %477 = vmatpush1.msra.mxu0 0.0
    %478 = vmatprep.subr.mxu0 0.0
    %479 = vmatpush1.msra.mxu0 0.0
    %480 = vmatprep.subr.mxu0 0.0
    %481 = vmatpush1.msra.mxu0 0.0
    %482 = vmatprep.subr.mxu0 0.0
    %483 = vmatpush1.msra.mxu0 0.0
    %484 = vmatprep.subr.mxu0 0.0
    %485 = vmatpush1.msra.mxu0 0.0
    %486 = vmatprep.subr.mxu0 0.0
    %487 = vmatpush1.msra.mxu0 0.0
    %488 = vmatprep.subr.mxu0 0.0
    %489 = vmatpush1.msra.mxu0 0.0
    %490 = vmatprep.subr.mxu0 0.0
    %491 = vmatpush1.msra.mxu0 0.0
    %492 = vmatprep.subr.mxu0 0.0
    %493 = vmatpush1.msra.mxu0 0.0
    %494 = vmatprep.subr.mxu0 0.0
    %495 = vmatpush1.msra.mxu0 0.0
    %496 = vmatprep.subr.mxu0 0.0
    %497 = vmatpush1.msra.mxu0 0.0
    %498 = vmatprep.subr.mxu0 0.0
    %499 = vmatpush1.msra.mxu0 0.0
    %500 = vmatprep.subr.mxu0 0.0
    %501 = vmatpush1.msra.mxu0 0.0
    %502 = vmatprep.subr.mxu0 0.0
    %503 = vmatpush1.msra.mxu0 0.0
    %504 = vmatprep.subr.mxu0 0.0
    %505 = vmatpush1.msra.mxu0 0.0
    %506 = vmatprep.mubr.f32.mxu0 0.0
    %507 = vmatmul.mubr.f32.gmra.mrb[0].mxu0 %v419
    %v508 = vpop.f32.mrb[0].mxu0
    %v509 = vadd.f32 0.0, %v508
    %v510 = vpop.f32.mrb[0].mxu0
    %511 = vmatprep.mubr.f32.mxu0 0.0
    %512 = vmatmul.mubr.f32.gmra.mrb[0].mxu0 %v422
    %v513 = vpop.f32.mrb[0].mxu0
    %v514 = vadd.f32 0.0, %v513
    %v515 = vpop.f32.mrb[0].mxu0
    %516 = vmatprep.mubr.f32.mxu0 0.0
    %517 = vmatmul.mubr.f32.gmra.mrb[0].mxu0 %v425
    %v518 = vpop.f32.mrb[0].mxu0
    %v519 = vadd.f32 0.0, %v518
    %v520 = vpop.f32.mrb[0].mxu0
    %521 = vmatprep.mubr.f32.mxu0 0.0
    %522 = vmatmul.mubr.f32.gmra.mrb[0].mxu0 %v428
    %v523 = vpop.f32.mrb[0].mxu0
    %v524 = vadd.f32 0.0, %v523
    %v525 = vpop.f32.mrb[0].mxu0
    %526 = vmatprep.mubr.f32.mxu0 0.0
    %527 = vmatmul.mubr.f32.gmra.mrb[0].mxu0 %v431
    %v528 = vpop.f32.mrb[0].mxu0
    %v529 = vadd.f32 0.0, %v528
    %v530 = vpop.f32.mrb[0].mxu0
    %531 = vmatprep.mubr.f32.mxu0 0.0
    %532 = vmatmul.mubr.f32.gmra.mrb[0].mxu0 %v434
    %v533 = vpop.f32.mrb[0].mxu0
    %v534 = vadd.f32 0.0, %v533
    %v535 = vpop.f32.mrb[0].mxu0
    %536 = vmatprep.mubr.f32.mxu0 0.0
    %537 = vmatmul.mubr.f32.gmra.mrb[0].mxu0 %v437
    %v538 = vpop.f32.mrb[0].mxu0
    %v539 = vadd.f32 0.0, %v538
    %v540 = vpop.f32.mrb[0].mxu0
    %541 = vmatprep.mubr.f32.mxu0 0.0
    %542 = vmatmul.mubr.f32.gmra.mrb[0].mxu0 %v440
    %v543 = vpop.f32.mrb[0].mxu0
    %v544 = vadd.f32 0.0, %v543
    %v545 = vpop.f32.mrb[0].mxu0
    %546 = vdwg.mxu0
    %v547 = vmul.f32 %v509, %v183
    %v548 = vmul.f32 %v514, %v184
    %v549 = vmul.f32 %v519, %v185
    %v550 = vmul.f32 %v524, %v186
    %v551 = vmul.f32 %v529, %v187
    %v552 = vmul.f32 %v534, %v188
    %v553 = vmul.f32 %v539, %v189
    %v554 = vmul.f32 %v544, %v190
    %555 = vrot.lane.b32.xlu0 %v313, 64
    %v556 = vpop.permute.xlu0 %555
    %557 = vrot.lane.b32.xlu0 %v318, 64
    %v558 = vpop.permute.xlu0 %557
    %561 = vmatprep.subr.mxu0 0.0
    %562 = vmatpush1.msra.mxu0 %v556
    %563 = vmatprep.subr.mxu0 0.0
    %564 = vmatpush1.msra.mxu0 %v558
    %565 = vmatprep.subr.mxu0 0.0
    %566 = vmatpush1.msra.mxu0 0.0
    %567 = vmatprep.subr.mxu0 0.0
    %568 = vmatpush1.msra.mxu0 0.0
    %569 = vmatprep.subr.mxu0 0.0
    %570 = vmatpush1.msra.mxu0 0.0
    %571 = vmatprep.subr.mxu0 0.0
    %572 = vmatpush1.msra.mxu0 0.0
    %573 = vmatprep.subr.mxu0 0.0
    %574 = vmatpush1.msra.mxu0 0.0
    %575 = vmatprep.subr.mxu0 0.0
    %576 = vmatpush1.msra.mxu0 0.0
    %577 = vmatprep.subr.mxu0 0.0
    %578 = vmatpush1.msra.mxu0 0.0
    %579 = vmatprep.subr.mxu0 0.0
    %580 = vmatpush1.msra.mxu0 0.0
    %581 = vmatprep.subr.mxu0 0.0
    %582 = vmatpush1.msra.mxu0 0.0
    %583 = vmatprep.subr.mxu0 0.0
    %584 = vmatpush1.msra.mxu0 0.0
    %585 = vmatprep.subr.mxu0 0.0
    %586 = vmatpush1.msra.mxu0 0.0
    %587 = vmatprep.subr.mxu0 0.0
    %588 = vmatpush1.msra.mxu0 0.0
    %589 = vmatprep.subr.mxu0 0.0
    %590 = vmatpush1.msra.mxu0 0.0
    %591 = vmatprep.subr.mxu0 0.0
    %592 = vmatpush1.msra.mxu0 0.0
    %593 = vmatprep.subr.mxu0 0.0
    %594 = vmatpush1.msra.mxu0 0.0
    %595 = vmatprep.subr.mxu0 0.0
    %596 = vmatpush1.msra.mxu0 0.0
    %597 = vmatprep.subr.mxu0 0.0
    %598 = vmatpush1.msra.mxu0 0.0
    %599 = vmatprep.subr.mxu0 0.0
    %600 = vmatpush1.msra.mxu0 0.0
    %601 = vmatprep.subr.mxu0 0.0
    %602 = vmatpush1.msra.mxu0 0.0
    %603 = vmatprep.subr.mxu0 0.0
    %604 = vmatpush1.msra.mxu0 0.0
    %605 = vmatprep.subr.mxu0 0.0
    %606 = vmatpush1.msra.mxu0 0.0
    %607 = vmatprep.subr.mxu0 0.0
    %608 = vmatpush1.msra.mxu0 0.0
    %609 = vmatprep.subr.mxu0 0.0
    %610 = vmatpush1.msra.mxu0 0.0
    %611 = vmatprep.subr.mxu0 0.0
    %612 = vmatpush1.msra.mxu0 0.0
    %613 = vmatprep.subr.mxu0 0.0
    %614 = vmatpush1.msra.mxu0 0.0
    %615 = vmatprep.subr.mxu0 0.0
    %616 = vmatpush1.msra.mxu0 0.0
    %617 = vmatprep.subr.mxu0 0.0
    %618 = vmatpush1.msra.mxu0 0.0
    %619 = vmatprep.subr.mxu0 0.0
    %620 = vmatpush1.msra.mxu0 0.0
    %621 = vmatprep.subr.mxu0 0.0
    %622 = vmatpush1.msra.mxu0 0.0
    %623 = vmatprep.subr.mxu0 0.0
    %624 = vmatpush1.msra.mxu0 0.0
    %625 = vmatprep.mubr.f32.mxu0 0.0
    %626 = vmatmul.mubr.f32.gmra.mrb[0].mxu0 %v419
    %v627 = vpop.f32.mrb[0].mxu0
    %v628 = vadd.f32 0.0, %v627
    %v629 = vpop.f32.mrb[0].mxu0
    %630 = vmatprep.mubr.f32.mxu0 0.0
    %631 = vmatmul.mubr.f32.gmra.mrb[0].mxu0 %v422
    %v632 = vpop.f32.mrb[0].mxu0
    %v633 = vadd.f32 0.0, %v632
    %v634 = vpop.f32.mrb[0].mxu0
    %635 = vmatprep.mubr.f32.mxu0 0.0
    %636 = vmatmul.mubr.f32.gmra.mrb[0].mxu0 %v425
    %v637 = vpop.f32.mrb[0].mxu0
    %v638 = vadd.f32 0.0, %v637
    %v639 = vpop.f32.mrb[0].mxu0
    %640 = vmatprep.mubr.f32.mxu0 0.0
    %641 = vmatmul.mubr.f32.gmra.mrb[0].mxu0 %v428
    %v642 = vpop.f32.mrb[0].mxu0
    %v643 = vadd.f32 0.0, %v642
    %v644 = vpop.f32.mrb[0].mxu0
    %645 = vmatprep.mubr.f32.mxu0 0.0
    %646 = vmatmul.mubr.f32.gmra.mrb[0].mxu0 %v431
    %v647 = vpop.f32.mrb[0].mxu0
    %v648 = vadd.f32 0.0, %v647
    %v649 = vpop.f32.mrb[0].mxu0
    %650 = vmatprep.mubr.f32.mxu0 0.0
    %651 = vmatmul.mubr.f32.gmra.mrb[0].mxu0 %v434
    %v652 = vpop.f32.mrb[0].mxu0
    %v653 = vadd.f32 0.0, %v652
    %v654 = vpop.f32.mrb[0].mxu0
    %655 = vmatprep.mubr.f32.mxu0 0.0
    %656 = vmatmul.mubr.f32.gmra.mrb[0].mxu0 %v437
    %v657 = vpop.f32.mrb[0].mxu0
    %v658 = vadd.f32 0.0, %v657
    %v659 = vpop.f32.mrb[0].mxu0
    %660 = vmatprep.mubr.f32.mxu0 0.0
    %661 = vmatmul.mubr.f32.gmra.mrb[0].mxu0 %v440
    %v662 = vpop.f32.mrb[0].mxu0
    %v663 = vadd.f32 0.0, %v662
    %v664 = vpop.f32.mrb[0].mxu0
    %665 = vdwg.mxu0
    %v666 = vmul.f32 %v628, %v183
    %v667 = vmul.f32 %v633, %v184
    %v668 = vmul.f32 %v638, %v185
    %v669 = vmul.f32 %v643, %v186
    %v670 = vmul.f32 %v648, %v187
    %v671 = vmul.f32 %v653, %v188
    %v672 = vmul.f32 %v658, %v189
    %v673 = vmul.f32 %v663, %v190
    %v674 = vsel %vm212, %v407, 0
    %v676 = vsel %vm212, %v408, 0
    %v679 = vsel %vm212, %v547, 0
    %v682 = vsel %vm212, %v548, 0
    %v685 = vsel %vm212, %v549, 0
    %v688 = vsel %vm212, %v550, 0
    %v691 = vsel %vm212, %v551, 0
    %v694 = vsel %vm212, %v552, 0
    %v697 = vsel %vm212, %v553, 0
    %v700 = vsel %vm212, %v554, 0
    %702 = vmatprep.subr.mxu0 0.0
    %703 = vmatpush1.xpose.msra.mxu0 %v679
    %704 = vmatprep.subr.mxu0 0.0
    %705 = vmatpush1.xpose.msra.mxu0 %v682
    %706 = vmatprep.subr.mxu0 0.0
    %707 = vmatpush1.xpose.msra.mxu0 %v685
    %708 = vmatprep.subr.mxu0 0.0
    %709 = vmatpush1.xpose.msra.mxu0 %v688
    %710 = vmatprep.subr.mxu0 0.0
    %711 = vmatpush1.xpose.msra.mxu0 %v691
    %712 = vmatprep.subr.mxu0 0.0
    %713 = vmatpush1.xpose.msra.mxu0 %v694
    %714 = vmatprep.subr.mxu0 0.0
    %715 = vmatpush1.xpose.msra.mxu0 %v697
    %716 = vmatprep.subr.mxu0 0.0
    %717 = vmatpush1.xpose.msra.mxu0 %v700
    %718 = vmatprep.subr.mxu0 0.0
    %719 = vmatpush1.xpose.msra.mxu0 0.0
    %720 = vmatprep.subr.mxu0 0.0
    %721 = vmatpush1.xpose.msra.mxu0 0.0
    %722 = vmatprep.subr.mxu0 0.0
    %723 = vmatpush1.xpose.msra.mxu0 0.0
    %724 = vmatprep.subr.mxu0 0.0
    %725 = vmatpush1.xpose.msra.mxu0 0.0
    %726 = vmatprep.subr.mxu0 0.0
    %727 = vmatpush1.xpose.msra.mxu0 0.0
    %728 = vmatprep.subr.mxu0 0.0
    %729 = vmatpush1.xpose.msra.mxu0 0.0
    %730 = vmatprep.subr.mxu0 0.0
    %731 = vmatpush1.xpose.msra.mxu0 0.0
    %732 = vmatprep.subr.mxu0 0.0
    %733 = vmatpush1.xpose.msra.mxu0 0.0
    %734 = vmatprep.subr.mxu0 0.0
    %735 = vmatpush1.xpose.msra.mxu0 0.0
    %736 = vmatprep.subr.mxu0 0.0
    %737 = vmatpush1.xpose.msra.mxu0 0.0
    %738 = vmatprep.subr.mxu0 0.0
    %739 = vmatpush1.xpose.msra.mxu0 0.0
    %740 = vmatprep.subr.mxu0 0.0
    %741 = vmatpush1.xpose.msra.mxu0 0.0
    %742 = vmatprep.subr.mxu0 0.0
    %743 = vmatpush1.xpose.msra.mxu0 0.0
    %744 = vmatprep.subr.mxu0 0.0
    %745 = vmatpush1.xpose.msra.mxu0 0.0
    %746 = vmatprep.subr.mxu0 0.0
    %747 = vmatpush1.xpose.msra.mxu0 0.0
    %748 = vmatprep.subr.mxu0 0.0
    %749 = vmatpush1.xpose.msra.mxu0 0.0
    %750 = vmatprep.subr.mxu0 0.0
    %751 = vmatpush1.xpose.msra.mxu0 0.0
    %752 = vmatprep.subr.mxu0 0.0
    %753 = vmatpush1.xpose.msra.mxu0 0.0
    %754 = vmatprep.subr.mxu0 0.0
    %755 = vmatpush1.xpose.msra.mxu0 0.0
    %756 = vmatprep.subr.mxu0 0.0
    %757 = vmatpush1.xpose.msra.mxu0 0.0
    %758 = vmatprep.subr.mxu0 0.0
    %759 = vmatpush1.xpose.msra.mxu0 0.0
    %760 = vmatprep.subr.mxu0 0.0
    %761 = vmatpush1.xpose.msra.mxu0 0.0
    %762 = vmatprep.subr.mxu0 0.0
    %763 = vmatpush1.xpose.msra.mxu0 0.0
    %764 = vmatprep.subr.mxu0 0.0
    %765 = vmatpush1.xpose.msra.mxu0 0.0
    %766 = vmatprep.mubr.f32.mxu0 0.0
    %767 = vmatmul.mubr.f32.gmra.mrb[0].mxu0 %v674
    %v768 = vpop.f32.mrb[0].mxu0
    %v769 = vadd.f32 0.0, %v768
    %v770 = vpop.f32.mrb[0].mxu0
    %771 = vmatprep.mubr.f32.mxu0 0.0
    %772 = vmatmul.mubr.f32.gmra.mrb[0].mxu0 %v676
    %v773 = vpop.f32.mrb[0].mxu0
    %v774 = vadd.f32 0.0, %v773
    %v775 = vpop.f32.mrb[0].mxu0
    %776 = vdwg.mxu0
    %v777 = vmul.f32 %v769, 0.35355338
    %v778 = vmul.f32 %v774, 0.35355338
    %v779 = vadd.f32 %v777, %v199
    %v780 = vadd.f32 %v778, %v200
    %v781 = vsel %vm323, %v779, -inf
    %782 = vmax.xlane.f32.xlu0 %v781
    %v783 = vpop.xlane.xlu0 %782
    %v784 = vsel %vm323, %v780, -inf
    %785 = vmax.xlane.f32.xlu0 %v784
    %v786 = vpop.xlane.xlu0 %785
    %v787 = vsub.f32 %v779, %v783
    %v788 = vsub.f32 %v780, %v786
    %v789 = vmul.f32 %v787, 1.442695
    %v790 = vpow.pop %v789
    %v791 = vmul.f32 %v788, 1.442695
    %v792 = vpow.pop %v791
    %v794 = vsel %vm323, %v790, 0
    %v797 = vsel %vm323, %v792, 0
    %799 = vmatprep.subr.mxu0 0.0
    %800 = vmatpush1.msra.mxu0 %v191
    %801 = vmatprep.subr.mxu0 0.0
    %802 = vmatpush1.msra.mxu0 %v192
    %803 = vmatprep.subr.mxu0 0.0
    %804 = vmatpush1.msra.mxu0 %v193
    %805 = vmatprep.subr.mxu0 0.0
    %806 = vmatpush1.msra.mxu0 %v194
    %807 = vmatprep.subr.mxu0 0.0
    %808 = vmatpush1.msra.mxu0 %v195
    %809 = vmatprep.subr.mxu0 0.0
    %810 = vmatpush1.msra.mxu0 %v196
    %811 = vmatprep.subr.mxu0 0.0
    %812 = vmatpush1.msra.mxu0 %v197
    %813 = vmatprep.subr.mxu0 0.0
    %814 = vmatpush1.msra.mxu0 %v198
    %815 = vmatprep.subr.mxu0 0.0
    %816 = vmatpush1.msra.mxu0 0.0
    %817 = vmatprep.subr.mxu0 0.0
    %818 = vmatpush1.msra.mxu0 0.0
    %819 = vmatprep.subr.mxu0 0.0
    %820 = vmatpush1.msra.mxu0 0.0
    %821 = vmatprep.subr.mxu0 0.0
    %822 = vmatpush1.msra.mxu0 0.0
    %823 = vmatprep.subr.mxu0 0.0
    %824 = vmatpush1.msra.mxu0 0.0
    %825 = vmatprep.subr.mxu0 0.0
    %826 = vmatpush1.msra.mxu0 0.0
    %827 = vmatprep.subr.mxu0 0.0
    %828 = vmatpush1.msra.mxu0 0.0
    %829 = vmatprep.subr.mxu0 0.0
    %830 = vmatpush1.msra.mxu0 0.0
    %831 = vmatprep.subr.mxu0 0.0
    %832 = vmatpush1.msra.mxu0 0.0
    %833 = vmatprep.subr.mxu0 0.0
    %834 = vmatpush1.msra.mxu0 0.0
    %835 = vmatprep.subr.mxu0 0.0
    %836 = vmatpush1.msra.mxu0 0.0
    %837 = vmatprep.subr.mxu0 0.0
    %838 = vmatpush1.msra.mxu0 0.0
    %839 = vmatprep.subr.mxu0 0.0
    %840 = vmatpush1.msra.mxu0 0.0
    %841 = vmatprep.subr.mxu0 0.0
    %842 = vmatpush1.msra.mxu0 0.0
    %843 = vmatprep.subr.mxu0 0.0
    %844 = vmatpush1.msra.mxu0 0.0
    %845 = vmatprep.subr.mxu0 0.0
    %846 = vmatpush1.msra.mxu0 0.0
    %847 = vmatprep.subr.mxu0 0.0
    %848 = vmatpush1.msra.mxu0 0.0
    %849 = vmatprep.subr.mxu0 0.0
    %850 = vmatpush1.msra.mxu0 0.0
    %851 = vmatprep.subr.mxu0 0.0
    %852 = vmatpush1.msra.mxu0 0.0
    %853 = vmatprep.subr.mxu0 0.0
    %854 = vmatpush1.msra.mxu0 0.0
    %855 = vmatprep.subr.mxu0 0.0
    %856 = vmatpush1.msra.mxu0 0.0
    %857 = vmatprep.subr.mxu0 0.0
    %858 = vmatpush1.msra.mxu0 0.0
    %859 = vmatprep.subr.mxu0 0.0
    %860 = vmatpush1.msra.mxu0 0.0
    %861 = vmatprep.subr.mxu0 0.0
    %862 = vmatpush1.msra.mxu0 0.0
    %863 = vmatprep.mubr.f32.mxu0 0.0
    %864 = vmatmul.mubr.f32.gmra.mrb[0].mxu0 %v794
    %v865 = vpop.f32.mrb[0].mxu0
    %v866 = vadd.f32 0.0, %v865
    %v867 = vpop.f32.mrb[0].mxu0
    %868 = vmatprep.mubr.f32.mxu0 0.0
    %869 = vmatmul.mubr.f32.gmra.mrb[0].mxu0 %v797
    %v870 = vpop.f32.mrb[0].mxu0
    %v871 = vadd.f32 0.0, %v870
    %v872 = vpop.f32.mrb[0].mxu0
    %873 = vdwg.mxu0
    %v874 = vmax.f32 %v866, 1e-30
    %v875 = vmax.f32 %v871, 1e-30
    %v876 = vrcp.pop %v874
    %v877 = vrcp.pop %v875
    %v878 = vmul.f32 %v790, %v876
    %v879 = vmul.f32 %v792, %v877
    %v881 = vsel %vm323, %v878, 0
    %v884 = vsel %vm323, %v879, 0
    %886 = vmatprep.subr.mxu0 0.0
    %887 = vmatpush1.msra.mxu0 %v666
    %888 = vmatprep.subr.mxu0 0.0
    %889 = vmatpush1.msra.mxu0 %v667
    %890 = vmatprep.subr.mxu0 0.0
    %891 = vmatpush1.msra.mxu0 %v668
    %892 = vmatprep.subr.mxu0 0.0
    %893 = vmatpush1.msra.mxu0 %v669
    %894 = vmatprep.subr.mxu0 0.0
    %895 = vmatpush1.msra.mxu0 %v670
    %896 = vmatprep.subr.mxu0 0.0
    %897 = vmatpush1.msra.mxu0 %v671
    %898 = vmatprep.subr.mxu0 0.0
    %899 = vmatpush1.msra.mxu0 %v672
    %900 = vmatprep.subr.mxu0 0.0
    %901 = vmatpush1.msra.mxu0 %v673
    %902 = vmatprep.subr.mxu0 0.0
    %903 = vmatpush1.msra.mxu0 0.0
    %904 = vmatprep.subr.mxu0 0.0
    %905 = vmatpush1.msra.mxu0 0.0
    %906 = vmatprep.subr.mxu0 0.0
    %907 = vmatpush1.msra.mxu0 0.0
    %908 = vmatprep.subr.mxu0 0.0
    %909 = vmatpush1.msra.mxu0 0.0
    %910 = vmatprep.subr.mxu0 0.0
    %911 = vmatpush1.msra.mxu0 0.0
    %912 = vmatprep.subr.mxu0 0.0
    %913 = vmatpush1.msra.mxu0 0.0
    %914 = vmatprep.subr.mxu0 0.0
    %915 = vmatpush1.msra.mxu0 0.0
    %916 = vmatprep.subr.mxu0 0.0
    %917 = vmatpush1.msra.mxu0 0.0
    %918 = vmatprep.subr.mxu0 0.0
    %919 = vmatpush1.msra.mxu0 0.0
    %920 = vmatprep.subr.mxu0 0.0
    %921 = vmatpush1.msra.mxu0 0.0
    %922 = vmatprep.subr.mxu0 0.0
    %923 = vmatpush1.msra.mxu0 0.0
    %924 = vmatprep.subr.mxu0 0.0
    %925 = vmatpush1.msra.mxu0 0.0
    %926 = vmatprep.subr.mxu0 0.0
    %927 = vmatpush1.msra.mxu0 0.0
    %928 = vmatprep.subr.mxu0 0.0
    %929 = vmatpush1.msra.mxu0 0.0
    %930 = vmatprep.subr.mxu0 0.0
    %931 = vmatpush1.msra.mxu0 0.0
    %932 = vmatprep.subr.mxu0 0.0
    %933 = vmatpush1.msra.mxu0 0.0
    %934 = vmatprep.subr.mxu0 0.0
    %935 = vmatpush1.msra.mxu0 0.0
    %936 = vmatprep.subr.mxu0 0.0
    %937 = vmatpush1.msra.mxu0 0.0
    %938 = vmatprep.subr.mxu0 0.0
    %939 = vmatpush1.msra.mxu0 0.0
    %940 = vmatprep.subr.mxu0 0.0
    %941 = vmatpush1.msra.mxu0 0.0
    %942 = vmatprep.subr.mxu0 0.0
    %943 = vmatpush1.msra.mxu0 0.0
    %944 = vmatprep.subr.mxu0 0.0
    %945 = vmatpush1.msra.mxu0 0.0
    %946 = vmatprep.subr.mxu0 0.0
    %947 = vmatpush1.msra.mxu0 0.0
    %948 = vmatprep.subr.mxu0 0.0
    %949 = vmatpush1.msra.mxu0 0.0
    %950 = vmatprep.mubr.f32.mxu0 0.0
    %951 = vmatmul.mubr.f32.gmra.mrb[0].mxu0 %v881
    %v952 = vpop.f32.mrb[0].mxu0
    %v953 = vadd.f32 0.0, %v952
    %v954 = vpop.f32.mrb[0].mxu0
    %955 = vmatprep.mubr.f32.mxu0 0.0
    %956 = vmatmul.mubr.f32.gmra.mrb[0].mxu0 %v884
    %v957 = vpop.f32.mrb[0].mxu0
    %v958 = vadd.f32 0.0, %v957
    %v959 = vpop.f32.mrb[0].mxu0
    %960 = vdwg.mxu0
    %v961 = vld [vmem:[#allocation10] sm:$0xff]
    %v962 = vld [vmem:[#allocation10 + $0x8] sm:$0xff]
    %v963 = vld [vmem:[#allocation10 + $0x10] sm:$0xff]
    %v964 = vld [vmem:[#allocation10 + $0x18] sm:$0xff]
    %v966 = vsel %vm212, %v953, 0
    %v969 = vsel %vm212, %v958, 0
    %971 = vmatprep.subr.mxu0 0.0
    %972 = vmatpush1.msra.mxu0 %v961
    %973 = vmatprep.subr.mxu0 0.0
    %974 = vmatpush1.msra.mxu0 %v962
    %975 = vmatprep.subr.mxu0 0.0
    %976 = vmatpush1.msra.mxu0 %v963
    %977 = vmatprep.subr.mxu0 0.0
    %978 = vmatpush1.msra.mxu0 %v964
    %979 = vmatprep.subr.mxu0 0.0
    %980 = vmatpush1.msra.mxu0 0.0
    %981 = vmatprep.subr.mxu0 0.0
    %982 = vmatpush1.msra.mxu0 0.0
    %983 = vmatprep.subr.mxu0 0.0
    %984 = vmatpush1.msra.mxu0 0.0
    %985 = vmatprep.subr.mxu0 0.0
    %986 = vmatpush1.msra.mxu0 0.0
    %987 = vmatprep.subr.mxu0 0.0
    %988 = vmatpush1.msra.mxu0 0.0
    %989 = vmatprep.subr.mxu0 0.0
    %990 = vmatpush1.msra.mxu0 0.0
    %991 = vmatprep.subr.mxu0 0.0
    %992 = vmatpush1.msra.mxu0 0.0
    %993 = vmatprep.subr.mxu0 0.0
    %994 = vmatpush1.msra.mxu0 0.0
    %995 = vmatprep.subr.mxu0 0.0
    %996 = vmatpush1.msra.mxu0 0.0
    %997 = vmatprep.subr.mxu0 0.0
    %998 = vmatpush1.msra.mxu0 0.0
    %999 = vmatprep.subr.mxu0 0.0
    %1000 = vmatpush1.msra.mxu0 0.0
    %1001 = vmatprep.subr.mxu0 0.0
    %1002 = vmatpush1.msra.mxu0 0.0
    %1003 = vmatprep.subr.mxu0 0.0
    %1004 = vmatpush1.msra.mxu0 0.0
    %1005 = vmatprep.subr.mxu0 0.0
    %1006 = vmatpush1.msra.mxu0 0.0
    %1007 = vmatprep.subr.mxu0 0.0
    %1008 = vmatpush1.msra.mxu0 0.0
    %1009 = vmatprep.subr.mxu0 0.0
    %1010 = vmatpush1.msra.mxu0 0.0
    %1011 = vmatprep.subr.mxu0 0.0
    %1012 = vmatpush1.msra.mxu0 0.0
    %1013 = vmatprep.subr.mxu0 0.0
    %1014 = vmatpush1.msra.mxu0 0.0
    %1015 = vmatprep.subr.mxu0 0.0
    %1016 = vmatpush1.msra.mxu0 0.0
    %1017 = vmatprep.subr.mxu0 0.0
    %1018 = vmatpush1.msra.mxu0 0.0
    %1019 = vmatprep.subr.mxu0 0.0
    %1020 = vmatpush1.msra.mxu0 0.0
    %1021 = vmatprep.subr.mxu0 0.0
    %1022 = vmatpush1.msra.mxu0 0.0
    %1023 = vmatprep.subr.mxu0 0.0
    %1024 = vmatpush1.msra.mxu0 0.0
    %1025 = vmatprep.subr.mxu0 0.0
    %1026 = vmatpush1.msra.mxu0 0.0
    %1027 = vmatprep.subr.mxu0 0.0
    %1028 = vmatpush1.msra.mxu0 0.0
    %1029 = vmatprep.subr.mxu0 0.0
    %1030 = vmatpush1.msra.mxu0 0.0
    %1031 = vmatprep.subr.mxu0 0.0
    %1032 = vmatpush1.msra.mxu0 0.0
    %1033 = vmatprep.subr.mxu0 0.0
    %1034 = vmatpush1.msra.mxu0 0.0
    %1035 = vmatprep.mubr.f32.mxu0 0.0
    %1036 = vmatmul.mubr.f32.gmra.mrb[0].mxu0 %v966
    %v1037 = vpop.f32.mrb[0].mxu0
    %v1038 = vadd.f32 0.0, %v1037
    %v1039 = vpop.f32.mrb[0].mxu0
    %1040 = vmatprep.mubr.f32.mxu0 0.0
    %1041 = vmatmul.mubr.f32.gmra.mrb[0].mxu0 %v969
    %v1042 = vpop.f32.mrb[0].mxu0
    %v1043 = vadd.f32 0.0, %v1042
    %v1044 = vpop.f32.mrb[0].mxu0
    %1045 = vdwg.mxu0
    %v1046 = vadd.f32 %v169, %v1038
    %v1047 = vadd.f32 %v170, %v1043
    %v1048 = vld [vmem:[%s12] sm:$0x1]
    %v1049 = vmul.f32 %v1046, %v1046
    %v1050 = vmul.f32 %v1047, %v1047
    %v1051 = vsel %vm212, %v1049, 0.0
    %1052 = vadd.xlane.f32.xlu0 %v1051
    %v1053 = vpop.xlane.xlu0 %1052
    %v1054 = vsel %vm212, %v1050, 0.0
    %1055 = vadd.xlane.f32.xlu0 %v1054
    %v1056 = vpop.xlane.xlu0 %1055
    %v1057 = vmul.f32 %v1053, %v219
    %v1058 = vmul.f32 %v1056, %v219
    %v1059 = vadd.f32 %v1057, 1e-06
    %v1060 = vadd.f32 %v1058, 1e-06
    %v1061 = vrsqrt.pop %v1059
    %v1062 = vrsqrt.pop %v1060
    %v1063 = vmul.f32 %v1046, %v1061
    %v1064 = vmul.f32 %v1047, %v1062
    %v1066 = vlaneseq
    %v1067 = vshrl.u32 %v1066, 7
    %v1068 = vsub.s32 0, %v1067
    %v1069 = vrot.slane %v1048, %v1068
    %v1071 = vmul.f32 %v1063, %v1069
    %v1072 = vmul.f32 %v1064, %v1069
    %v1073 = vld [vmem:[#allocation11] sm:$0xff]
    %v1074 = vld [vmem:[#allocation11 + $0x8] sm:$0xff]
    %v1075 = vld [vmem:[#allocation11 + $0x10] sm:$0xff]
    %v1076 = vld [vmem:[#allocation11 + $0x18] sm:$0xff]
    %v1078 = vsel %vm212, %v1071, 0
    %v1081 = vsel %vm212, %v1072, 0
    %1083 = vmatprep.subr.mxu0 0.0
    %1084 = vmatpush1.msra.mxu0 %v1073
    %1085 = vmatprep.subr.mxu0 0.0
    %1086 = vmatpush1.msra.mxu0 %v1074
    %1087 = vmatprep.subr.mxu0 0.0
    %1088 = vmatpush1.msra.mxu0 %v1075
    %1089 = vmatprep.subr.mxu0 0.0
    %1090 = vmatpush1.msra.mxu0 %v1076
    %1091 = vmatprep.subr.mxu0 0.0
    %1092 = vmatpush1.msra.mxu0 0.0
    %1093 = vmatprep.subr.mxu0 0.0
    %1094 = vmatpush1.msra.mxu0 0.0
    %1095 = vmatprep.subr.mxu0 0.0
    %1096 = vmatpush1.msra.mxu0 0.0
    %1097 = vmatprep.subr.mxu0 0.0
    %1098 = vmatpush1.msra.mxu0 0.0
    %1099 = vmatprep.subr.mxu0 0.0
    %1100 = vmatpush1.msra.mxu0 0.0
    %1101 = vmatprep.subr.mxu0 0.0
    %1102 = vmatpush1.msra.mxu0 0.0
    %1103 = vmatprep.subr.mxu0 0.0
    %1104 = vmatpush1.msra.mxu0 0.0
    %1105 = vmatprep.subr.mxu0 0.0
    %1106 = vmatpush1.msra.mxu0 0.0
    %1107 = vmatprep.subr.mxu0 0.0
    %1108 = vmatpush1.msra.mxu0 0.0
    %1109 = vmatprep.subr.mxu0 0.0
    %1110 = vmatpush1.msra.mxu0 0.0
    %1111 = vmatprep.subr.mxu0 0.0
    %1112 = vmatpush1.msra.mxu0 0.0
    %1113 = vmatprep.subr.mxu0 0.0
    %1114 = vmatpush1.msra.mxu0 0.0
    %1115 = vmatprep.subr.mxu0 0.0
    %1116 = vmatpush1.msra.mxu0 0.0
    %1117 = vmatprep.subr.mxu0 0.0
    %1118 = vmatpush1.msra.mxu0 0.0
    %1119 = vmatprep.subr.mxu0 0.0
    %1120 = vmatpush1.msra.mxu0 0.0
    %1121 = vmatprep.subr.mxu0 0.0
    %1122 = vmatpush1.msra.mxu0 0.0
    %1123 = vmatprep.subr.mxu0 0.0
    %1124 = vmatpush1.msra.mxu0 0.0
    %1125 = vmatprep.subr.mxu0 0.0
    %1126 = vmatpush1.msra.mxu0 0.0
    %1127 = vmatprep.subr.mxu0 0.0
    %1128 = vmatpush1.msra.mxu0 0.0
    %1129 = vmatprep.subr.mxu0 0.0
    %1130 = vmatpush1.msra.mxu0 0.0
    %1131 = vmatprep.subr.mxu0 0.0
    %1132 = vmatpush1.msra.mxu0 0.0
    %1133 = vmatprep.subr.mxu0 0.0
    %1134 = vmatpush1.msra.mxu0 0.0
    %1135 = vmatprep.subr.mxu0 0.0
    %1136 = vmatpush1.msra.mxu0 0.0
    %1137 = vmatprep.subr.mxu0 0.0
    %1138 = vmatpush1.msra.mxu0 0.0
    %1139 = vmatprep.subr.mxu0 0.0
    %1140 = vmatpush1.msra.mxu0 0.0
    %1141 = vmatprep.subr.mxu0 0.0
    %1142 = vmatpush1.msra.mxu0 0.0
    %1143 = vmatprep.subr.mxu0 0.0
    %1144 = vmatpush1.msra.mxu0 0.0
    %1145 = vmatprep.subr.mxu0 0.0
    %1146 = vmatpush1.msra.mxu0 0.0
    %1147 = vmatprep.mubr.f32.mxu0 0.0
    %1148 = vmatmul.mubr.f32.gmra.mrb[0].mxu0 %v1078
    %v1149 = vpop.f32.mrb[0].mxu0
    %v1150 = vadd.f32 0.0, %v1149
    %v1151 = vpop.f32.mrb[0].mxu0
    %1152 = vmatprep.mubr.f32.mxu0 0.0
    %1153 = vmatmul.mubr.f32.gmra.mrb[0].mxu0 %v1081
    %v1154 = vpop.f32.mrb[0].mxu0
    %v1155 = vadd.f32 0.0, %v1154
    %v1156 = vpop.f32.mrb[0].mxu0
    %1157 = vdwg.mxu0
    %v1158 = vxor.u32 %v1150, 2147483648
    %v1159 = vxor.u32 %v1155, 2147483648
    %v1160 = vmul.f32 %v1158, 1.442695
    %v1161 = vpow.pop %v1160
    %v1162 = vmul.f32 %v1159, 1.442695
    %v1163 = vpow.pop %v1162
    %v1164 = vadd.f32 %v1161, 1.0
    %v1165 = vadd.f32 %v1163, 1.0
    %v1166 = vrcp.pop %v1164
    %v1167 = vmul.f32 1.0, %v1166
    %v1168 = vrcp.pop %v1165
    %v1169 = vmul.f32 1.0, %v1168
    %v1170 = vmul.f32 %v1150, %v1167
    %v1171 = vmul.f32 %v1155, %v1169
    %1174 = vrot.lane.b32.xlu0 %v1170, 96
    %v1175 = vpop.permute.xlu0 %1174
    %1176 = vrot.lane.b32.xlu0 %v1171, 96
    %v1177 = vpop.permute.xlu0 %1176
    %v1180 = vmul.f32 %v1150, %v1175
    %v1181 = vmul.f32 %v1155, %v1177
    %v1182 = vld [vmem:[#allocation13] sm:$0xff]
    %v1183 = vld [vmem:[#allocation13 + $0x8] sm:$0xff]
    %v1184 = vld [vmem:[#allocation13 + $0x10] sm:$0xff]
    %v1185 = vld [vmem:[#allocation13 + $0x18] sm:$0xff]
    %v1187 = vsel %vm212, %v1180, 0
    %v1190 = vsel %vm212, %v1181, 0
    %1192 = vmatprep.subr.mxu0 0.0
    %1193 = vmatpush1.msra.mxu0 %v1182
    %1194 = vmatprep.subr.mxu0 0.0
    %1195 = vmatpush1.msra.mxu0 %v1183
    %1196 = vmatprep.subr.mxu0 0.0
    %1197 = vmatpush1.msra.mxu0 %v1184
    %1198 = vmatprep.subr.mxu0 0.0
    %1199 = vmatpush1.msra.mxu0 %v1185
    %1200 = vmatprep.subr.mxu0 0.0
    %1201 = vmatpush1.msra.mxu0 0.0
    %1202 = vmatprep.subr.mxu0 0.0
    %1203 = vmatpush1.msra.mxu0 0.0
    %1204 = vmatprep.subr.mxu0 0.0
    %1205 = vmatpush1.msra.mxu0 0.0
    %1206 = vmatprep.subr.mxu0 0.0
    %1207 = vmatpush1.msra.mxu0 0.0
    %1208 = vmatprep.subr.mxu0 0.0
    %1209 = vmatpush1.msra.mxu0 0.0
    %1210 = vmatprep.subr.mxu0 0.0
    %1211 = vmatpush1.msra.mxu0 0.0
    %1212 = vmatprep.subr.mxu0 0.0
    %1213 = vmatpush1.msra.mxu0 0.0
    %1214 = vmatprep.subr.mxu0 0.0
    %1215 = vmatpush1.msra.mxu0 0.0
    %1216 = vmatprep.subr.mxu0 0.0
    %1217 = vmatpush1.msra.mxu0 0.0
    %1218 = vmatprep.subr.mxu0 0.0
    %1219 = vmatpush1.msra.mxu0 0.0
    %1220 = vmatprep.subr.mxu0 0.0
    %1221 = vmatpush1.msra.mxu0 0.0
    %1222 = vmatprep.subr.mxu0 0.0
    %1223 = vmatpush1.msra.mxu0 0.0
    %1224 = vmatprep.subr.mxu0 0.0
    %1225 = vmatpush1.msra.mxu0 0.0
    %1226 = vmatprep.subr.mxu0 0.0
    %1227 = vmatpush1.msra.mxu0 0.0
    %1228 = vmatprep.subr.mxu0 0.0
    %1229 = vmatpush1.msra.mxu0 0.0
    %1230 = vmatprep.subr.mxu0 0.0
    %1231 = vmatpush1.msra.mxu0 0.0
    %1232 = vmatprep.subr.mxu0 0.0
    %1233 = vmatpush1.msra.mxu0 0.0
    %1234 = vmatprep.subr.mxu0 0.0
    %1235 = vmatpush1.msra.mxu0 0.0
    %1236 = vmatprep.subr.mxu0 0.0
    %1237 = vmatpush1.msra.mxu0 0.0
    %1238 = vmatprep.subr.mxu0 0.0
    %1239 = vmatpush1.msra.mxu0 0.0
    %1240 = vmatprep.subr.mxu0 0.0
    %1241 = vmatpush1.msra.mxu0 0.0
    %1242 = vmatprep.subr.mxu0 0.0
    %1243 = vmatpush1.msra.mxu0 0.0
    %1244 = vmatprep.subr.mxu0 0.0
    %1245 = vmatpush1.msra.mxu0 0.0
    %1246 = vmatprep.subr.mxu0 0.0
    %1247 = vmatpush1.msra.mxu0 0.0
    %1248 = vmatprep.subr.mxu0 0.0
    %1249 = vmatpush1.msra.mxu0 0.0
    %1250 = vmatprep.subr.mxu0 0.0
    %1251 = vmatpush1.msra.mxu0 0.0
    %1252 = vmatprep.subr.mxu0 0.0
    %1253 = vmatpush1.msra.mxu0 0.0
    %1254 = vmatprep.subr.mxu0 0.0
    %1255 = vmatpush1.msra.mxu0 0.0
    %1256 = vmatprep.mubr.f32.mxu0 0.0
    %1257 = vmatmul.mubr.f32.gmra.mrb[0].mxu0 %v1187
    %v1258 = vpop.f32.mrb[0].mxu0
    %v1259 = vadd.f32 0.0, %v1258
    %v1260 = vpop.f32.mrb[0].mxu0
    %1261 = vmatprep.mubr.f32.mxu0 0.0
    %1262 = vmatmul.mubr.f32.gmra.mrb[0].mxu0 %v1190
    %v1263 = vpop.f32.mrb[0].mxu0
    %v1264 = vadd.f32 0.0, %v1263
    %v1265 = vpop.f32.mrb[0].mxu0
    %1266 = vdwg.mxu0
    %v1267 = vadd.f32 %v1046, %v1259
    %v1268 = vadd.f32 %v1047, %v1264
    %s1269 = scalar_lea.vmem %s9, 1
    %v1270 = vld [vmem:[%s1269] sm:$0x1]
    %v1271 = vmul.f32 %v1267, %v1267
    %v1272 = vmul.f32 %v1268, %v1268
    %v1273 = vsel %vm212, %v1271, 0.0
    %1274 = vadd.xlane.f32.xlu0 %v1273
    %v1275 = vpop.xlane.xlu0 %1274
    %v1276 = vsel %vm212, %v1272, 0.0
    %1277 = vadd.xlane.f32.xlu0 %v1276
    %v1278 = vpop.xlane.xlu0 %1277
    %v1279 = vmul.f32 %v1275, %v219
    %v1280 = vmul.f32 %v1278, %v219
    %v1281 = vadd.f32 %v1279, 1e-06
    %v1282 = vadd.f32 %v1280, 1e-06
    %v1283 = vrsqrt.pop %v1281
    %v1284 = vrsqrt.pop %v1282
    %v1285 = vmul.f32 %v1267, %v1283
    %v1286 = vmul.f32 %v1268, %v1284
    %v1288 = vlaneseq
    %v1289 = vshrl.u32 %v1288, 7
    %v1290 = vsub.s32 0, %v1289
    %v1291 = vrot.slane %v1270, %v1290
    %v1293 = vmul.f32 %v1285, %v1291
    %v1294 = vmul.f32 %v1286, %v1291
    %s1295 = scalar_lea.vmem %s10, 32
    %v1296 = vld [vmem:[%s1295] sm:$0xff]
    %v1297 = vld [vmem:[%s1295 + $0x8] sm:$0xff]
    %v1298 = vld [vmem:[%s1295 + $0x10] sm:$0xff]
    %v1299 = vld [vmem:[%s1295 + $0x18] sm:$0xff]
    %v1301 = vsel %vm212, %v1293, 0
    %v1304 = vsel %vm212, %v1294, 0
    %1306 = vmatprep.subr.mxu0 0.0
    %1307 = vmatpush1.msra.mxu0 %v1296
    %1308 = vmatprep.subr.mxu0 0.0
    %1309 = vmatpush1.msra.mxu0 %v1297
    %1310 = vmatprep.subr.mxu0 0.0
    %1311 = vmatpush1.msra.mxu0 %v1298
    %1312 = vmatprep.subr.mxu0 0.0
    %1313 = vmatpush1.msra.mxu0 %v1299
    %1314 = vmatprep.subr.mxu0 0.0
    %1315 = vmatpush1.msra.mxu0 0.0
    %1316 = vmatprep.subr.mxu0 0.0
    %1317 = vmatpush1.msra.mxu0 0.0
    %1318 = vmatprep.subr.mxu0 0.0
    %1319 = vmatpush1.msra.mxu0 0.0
    %1320 = vmatprep.subr.mxu0 0.0
    %1321 = vmatpush1.msra.mxu0 0.0
    %1322 = vmatprep.subr.mxu0 0.0
    %1323 = vmatpush1.msra.mxu0 0.0
    %1324 = vmatprep.subr.mxu0 0.0
    %1325 = vmatpush1.msra.mxu0 0.0
    %1326 = vmatprep.subr.mxu0 0.0
    %1327 = vmatpush1.msra.mxu0 0.0
    %1328 = vmatprep.subr.mxu0 0.0
    %1329 = vmatpush1.msra.mxu0 0.0
    %1330 = vmatprep.subr.mxu0 0.0
    %1331 = vmatpush1.msra.mxu0 0.0
    %1332 = vmatprep.subr.mxu0 0.0
    %1333 = vmatpush1.msra.mxu0 0.0
    %1334 = vmatprep.subr.mxu0 0.0
    %1335 = vmatpush1.msra.mxu0 0.0
    %1336 = vmatprep.subr.mxu0 0.0
    %1337 = vmatpush1.msra.mxu0 0.0
    %1338 = vmatprep.subr.mxu0 0.0
    %1339 = vmatpush1.msra.mxu0 0.0
    %1340 = vmatprep.subr.mxu0 0.0
    %1341 = vmatpush1.msra.mxu0 0.0
    %1342 = vmatprep.subr.mxu0 0.0
    %1343 = vmatpush1.msra.mxu0 0.0
    %1344 = vmatprep.subr.mxu0 0.0
    %1345 = vmatpush1.msra.mxu0 0.0
    %1346 = vmatprep.subr.mxu0 0.0
    %1347 = vmatpush1.msra.mxu0 0.0
    %1348 = vmatprep.subr.mxu0 0.0
    %1349 = vmatpush1.msra.mxu0 0.0
    %1350 = vmatprep.subr.mxu0 0.0
    %1351 = vmatpush1.msra.mxu0 0.0
    %1352 = vmatprep.subr.mxu0 0.0
    %1353 = vmatpush1.msra.mxu0 0.0
    %1354 = vmatprep.subr.mxu0 0.0
    %1355 = vmatpush1.msra.mxu0 0.0
    %1356 = vmatprep.subr.mxu0 0.0
    %1357 = vmatpush1.msra.mxu0 0.0
    %1358 = vmatprep.subr.mxu0 0.0
    %1359 = vmatpush1.msra.mxu0 0.0
    %1360 = vmatprep.subr.mxu0 0.0
    %1361 = vmatpush1.msra.mxu0 0.0
    %1362 = vmatprep.subr.mxu0 0.0
    %1363 = vmatpush1.msra.mxu0 0.0
    %1364 = vmatprep.subr.mxu0 0.0
    %1365 = vmatpush1.msra.mxu0 0.0
    %1366 = vmatprep.subr.mxu0 0.0
    %1367 = vmatpush1.msra.mxu0 0.0
    %1368 = vmatprep.subr.mxu0 0.0
    %1369 = vmatpush1.msra.mxu0 0.0
    %1370 = vmatprep.mubr.f32.mxu0 0.0
    %1371 = vmatmul.mubr.f32.gmra.mrb[0].mxu0 %v1301
    %v1372 = vpop.f32.mrb[0].mxu0
    %v1373 = vadd.f32 0.0, %v1372
    %v1374 = vpop.f32.mrb[0].mxu0
    %1375 = vmatprep.mubr.f32.mxu0 0.0
    %1376 = vmatmul.mubr.f32.gmra.mrb[0].mxu0 %v1304
    %v1377 = vpop.f32.mrb[0].mxu0
    %v1378 = vadd.f32 0.0, %v1377
    %v1379 = vpop.f32.mrb[0].mxu0
    %1380 = vdwg.mxu0
    %v1381 = vmul.f32 %v1373, %v171
    %v1382 = vmul.f32 %v1378, %v172
    %v1384 = vsel %vm323, %v1373, 0
    %v1387 = vsel %vm323, %v1378, 0
    %1389 = vmatprep.subr.mxu0 0.0
    %1390 = vmatpush1.msra.mxu0 %v201
    %1391 = vmatprep.subr.mxu0 0.0
    %1392 = vmatpush1.msra.mxu0 %v202
    %1393 = vmatprep.subr.mxu0 0.0
    %1394 = vmatpush1.msra.mxu0 %v203
    %1395 = vmatprep.subr.mxu0 0.0
    %1396 = vmatpush1.msra.mxu0 %v204
    %1397 = vmatprep.subr.mxu0 0.0
    %1398 = vmatpush1.msra.mxu0 %v205
    %1399 = vmatprep.subr.mxu0 0.0
    %1400 = vmatpush1.msra.mxu0 %v206
    %1401 = vmatprep.subr.mxu0 0.0
    %1402 = vmatpush1.msra.mxu0 %v207
    %1403 = vmatprep.subr.mxu0 0.0
    %1404 = vmatpush1.msra.mxu0 %v208
    %1405 = vmatprep.subr.mxu0 0.0
    %1406 = vmatpush1.msra.mxu0 0.0
    %1407 = vmatprep.subr.mxu0 0.0
    %1408 = vmatpush1.msra.mxu0 0.0
    %1409 = vmatprep.subr.mxu0 0.0
    %1410 = vmatpush1.msra.mxu0 0.0
    %1411 = vmatprep.subr.mxu0 0.0
    %1412 = vmatpush1.msra.mxu0 0.0
    %1413 = vmatprep.subr.mxu0 0.0
    %1414 = vmatpush1.msra.mxu0 0.0
    %1415 = vmatprep.subr.mxu0 0.0
    %1416 = vmatpush1.msra.mxu0 0.0
    %1417 = vmatprep.subr.mxu0 0.0
    %1418 = vmatpush1.msra.mxu0 0.0
    %1419 = vmatprep.subr.mxu0 0.0
    %1420 = vmatpush1.msra.mxu0 0.0
    %1421 = vmatprep.subr.mxu0 0.0
    %1422 = vmatpush1.msra.mxu0 0.0
    %1423 = vmatprep.subr.mxu0 0.0
    %1424 = vmatpush1.msra.mxu0 0.0
    %1425 = vmatprep.subr.mxu0 0.0
    %1426 = vmatpush1.msra.mxu0 0.0
    %1427 = vmatprep.subr.mxu0 0.0
    %1428 = vmatpush1.msra.mxu0 0.0
    %1429 = vmatprep.subr.mxu0 0.0
    %1430 = vmatpush1.msra.mxu0 0.0
    %1431 = vmatprep.subr.mxu0 0.0
    %1432 = vmatpush1.msra.mxu0 0.0
    %1433 = vmatprep.subr.mxu0 0.0
    %1434 = vmatpush1.msra.mxu0 0.0
    %1435 = vmatprep.subr.mxu0 0.0
    %1436 = vmatpush1.msra.mxu0 0.0
    %1437 = vmatprep.subr.mxu0 0.0
    %1438 = vmatpush1.msra.mxu0 0.0
    %1439 = vmatprep.subr.mxu0 0.0
    %1440 = vmatpush1.msra.mxu0 0.0
    %1441 = vmatprep.subr.mxu0 0.0
    %1442 = vmatpush1.msra.mxu0 0.0
    %1443 = vmatprep.subr.mxu0 0.0
    %1444 = vmatpush1.msra.mxu0 0.0
    %1445 = vmatprep.subr.mxu0 0.0
    %1446 = vmatpush1.msra.mxu0 0.0
    %1447 = vmatprep.subr.mxu0 0.0
    %1448 = vmatpush1.msra.mxu0 0.0
    %1449 = vmatprep.subr.mxu0 0.0
    %1450 = vmatpush1.msra.mxu0 0.0
    %1451 = vmatprep.subr.mxu0 0.0
    %1452 = vmatpush1.msra.mxu0 0.0
    %1453 = vmatprep.mubr.f32.mxu0 0.0
    %1454 = vmatmul.mubr.f32.gmra.mrb[0].mxu0 %v1384
    %v1455 = vpop.f32.mrb[0].mxu0
    %v1456 = vadd.f32 0.0, %v1455
    %v1457 = vpop.f32.mrb[0].mxu0
    %1458 = vmatprep.mubr.f32.mxu0 0.0
    %1459 = vmatmul.mubr.f32.gmra.mrb[0].mxu0 %v1387
    %v1460 = vpop.f32.mrb[0].mxu0
    %v1461 = vadd.f32 0.0, %v1460
    %v1462 = vpop.f32.mrb[0].mxu0
    %1463 = vdwg.mxu0
    %v1464 = vmul.f32 %v1456, %v173
    %v1465 = vmul.f32 %v1461, %v174
    %v1466 = vadd.f32 %v1381, %v1464
    %v1467 = vadd.f32 %v1382, %v1465
    %1470 = vrot.lane.b32.xlu0 %v1466, 96
    %v1471 = vpop.permute.xlu0 %1470
    %1472 = vrot.lane.b32.xlu0 %v1467, 96
    %v1473 = vpop.permute.xlu0 %1472
    %1476 = vmatprep.subr.mxu0 0.0
    %1477 = vmatpush1.msra.mxu0 %v1471
    %1478 = vmatprep.subr.mxu0 0.0
    %1479 = vmatpush1.msra.mxu0 %v1473
    %1480 = vmatprep.subr.mxu0 0.0
    %1481 = vmatpush1.msra.mxu0 0.0
    %1482 = vmatprep.subr.mxu0 0.0
    %1483 = vmatpush1.msra.mxu0 0.0
    %1484 = vmatprep.subr.mxu0 0.0
    %1485 = vmatpush1.msra.mxu0 0.0
    %1486 = vmatprep.subr.mxu0 0.0
    %1487 = vmatpush1.msra.mxu0 0.0
    %1488 = vmatprep.subr.mxu0 0.0
    %1489 = vmatpush1.msra.mxu0 0.0
    %1490 = vmatprep.subr.mxu0 0.0
    %1491 = vmatpush1.msra.mxu0 0.0
    %1492 = vmatprep.subr.mxu0 0.0
    %1493 = vmatpush1.msra.mxu0 0.0
    %1494 = vmatprep.subr.mxu0 0.0
    %1495 = vmatpush1.msra.mxu0 0.0
    %1496 = vmatprep.subr.mxu0 0.0
    %1497 = vmatpush1.msra.mxu0 0.0
    %1498 = vmatprep.subr.mxu0 0.0
    %1499 = vmatpush1.msra.mxu0 0.0
    %1500 = vmatprep.subr.mxu0 0.0
    %1501 = vmatpush1.msra.mxu0 0.0
    %1502 = vmatprep.subr.mxu0 0.0
    %1503 = vmatpush1.msra.mxu0 0.0
    %1504 = vmatprep.subr.mxu0 0.0
    %1505 = vmatpush1.msra.mxu0 0.0
    %1506 = vmatprep.subr.mxu0 0.0
    %1507 = vmatpush1.msra.mxu0 0.0
    %1508 = vmatprep.subr.mxu0 0.0
    %1509 = vmatpush1.msra.mxu0 0.0
    %1510 = vmatprep.subr.mxu0 0.0
    %1511 = vmatpush1.msra.mxu0 0.0
    %1512 = vmatprep.subr.mxu0 0.0
    %1513 = vmatpush1.msra.mxu0 0.0
    %1514 = vmatprep.subr.mxu0 0.0
    %1515 = vmatpush1.msra.mxu0 0.0
    %1516 = vmatprep.subr.mxu0 0.0
    %1517 = vmatpush1.msra.mxu0 0.0
    %1518 = vmatprep.subr.mxu0 0.0
    %1519 = vmatpush1.msra.mxu0 0.0
    %1520 = vmatprep.subr.mxu0 0.0
    %1521 = vmatpush1.msra.mxu0 0.0
    %1522 = vmatprep.subr.mxu0 0.0
    %1523 = vmatpush1.msra.mxu0 0.0
    %1524 = vmatprep.subr.mxu0 0.0
    %1525 = vmatpush1.msra.mxu0 0.0
    %1526 = vmatprep.subr.mxu0 0.0
    %1527 = vmatpush1.msra.mxu0 0.0
    %1528 = vmatprep.subr.mxu0 0.0
    %1529 = vmatpush1.msra.mxu0 0.0
    %1530 = vmatprep.subr.mxu0 0.0
    %1531 = vmatpush1.msra.mxu0 0.0
    %1532 = vmatprep.subr.mxu0 0.0
    %1533 = vmatpush1.msra.mxu0 0.0
    %1534 = vmatprep.subr.mxu0 0.0
    %1535 = vmatpush1.msra.mxu0 0.0
    %1536 = vmatprep.subr.mxu0 0.0
    %1537 = vmatpush1.msra.mxu0 0.0
    %1538 = vmatprep.subr.mxu0 0.0
    %1539 = vmatpush1.msra.mxu0 0.0
    %1540 = vmatprep.mubr.f32.mxu0 0.0
    %1541 = vmatmul.mubr.f32.gmra.mrb[0].mxu0 %v419
    %v1542 = vpop.f32.mrb[0].mxu0
    %v1543 = vadd.f32 0.0, %v1542
    %v1544 = vpop.f32.mrb[0].mxu0
    %1545 = vmatprep.mubr.f32.mxu0 0.0
    %1546 = vmatmul.mubr.f32.gmra.mrb[0].mxu0 %v422
    %v1547 = vpop.f32.mrb[0].mxu0
    %v1548 = vadd.f32 0.0, %v1547
    %v1549 = vpop.f32.mrb[0].mxu0
    %1550 = vmatprep.mubr.f32.mxu0 0.0
    %1551 = vmatmul.mubr.f32.gmra.mrb[0].mxu0 %v425
    %v1552 = vpop.f32.mrb[0].mxu0
    %v1553 = vadd.f32 0.0, %v1552
    %v1554 = vpop.f32.mrb[0].mxu0
    %1555 = vmatprep.mubr.f32.mxu0 0.0
    %1556 = vmatmul.mubr.f32.gmra.mrb[0].mxu0 %v428
    %v1557 = vpop.f32.mrb[0].mxu0
    %v1558 = vadd.f32 0.0, %v1557
    %v1559 = vpop.f32.mrb[0].mxu0
    %1560 = vmatprep.mubr.f32.mxu0 0.0
    %1561 = vmatmul.mubr.f32.gmra.mrb[0].mxu0 %v431
    %v1562 = vpop.f32.mrb[0].mxu0
    %v1563 = vadd.f32 0.0, %v1562
    %v1564 = vpop.f32.mrb[0].mxu0
    %1565 = vmatprep.mubr.f32.mxu0 0.0
    %1566 = vmatmul.mubr.f32.gmra.mrb[0].mxu0 %v434
    %v1567 = vpop.f32.mrb[0].mxu0
    %v1568 = vadd.f32 0.0, %v1567
    %v1569 = vpop.f32.mrb[0].mxu0
    %1570 = vmatprep.mubr.f32.mxu0 0.0
    %1571 = vmatmul.mubr.f32.gmra.mrb[0].mxu0 %v437
    %v1572 = vpop.f32.mrb[0].mxu0
    %v1573 = vadd.f32 0.0, %v1572
    %v1574 = vpop.f32.mrb[0].mxu0
    %1575 = vmatprep.mubr.f32.mxu0 0.0
    %1576 = vmatmul.mubr.f32.gmra.mrb[0].mxu0 %v440
    %v1577 = vpop.f32.mrb[0].mxu0
    %v1578 = vadd.f32 0.0, %v1577
    %v1579 = vpop.f32.mrb[0].mxu0
    %1580 = vdwg.mxu0
    %v1581 = vmul.f32 %v1543, %v183
    %v1582 = vmul.f32 %v1548, %v184
    %v1583 = vmul.f32 %v1553, %v185
    %v1584 = vmul.f32 %v1558, %v186
    %v1585 = vmul.f32 %v1563, %v187
    %v1586 = vmul.f32 %v1568, %v188
    %v1587 = vmul.f32 %v1573, %v189
    %v1588 = vmul.f32 %v1578, %v190
    %1589 = vrot.lane.b32.xlu0 %v1373, 64
    %v1590 = vpop.permute.xlu0 %1589
    %1591 = vrot.lane.b32.xlu0 %v1378, 64
    %v1592 = vpop.permute.xlu0 %1591
    %1595 = vmatprep.subr.mxu0 0.0
    %1596 = vmatpush1.msra.mxu0 %v1590
    %1597 = vmatprep.subr.mxu0 0.0
    %1598 = vmatpush1.msra.mxu0 %v1592
    %1599 = vmatprep.subr.mxu0 0.0
    %1600 = vmatpush1.msra.mxu0 0.0
    %1601 = vmatprep.subr.mxu0 0.0
    %1602 = vmatpush1.msra.mxu0 0.0
    %1603 = vmatprep.subr.mxu0 0.0
    %1604 = vmatpush1.msra.mxu0 0.0
    %1605 = vmatprep.subr.mxu0 0.0
    %1606 = vmatpush1.msra.mxu0 0.0
    %1607 = vmatprep.subr.mxu0 0.0
    %1608 = vmatpush1.msra.mxu0 0.0
    %1609 = vmatprep.subr.mxu0 0.0
    %1610 = vmatpush1.msra.mxu0 0.0
    %1611 = vmatprep.subr.mxu0 0.0
    %1612 = vmatpush1.msra.mxu0 0.0
    %1613 = vmatprep.subr.mxu0 0.0
    %1614 = vmatpush1.msra.mxu0 0.0
    %1615 = vmatprep.subr.mxu0 0.0
    %1616 = vmatpush1.msra.mxu0 0.0
    %1617 = vmatprep.subr.mxu0 0.0
    %1618 = vmatpush1.msra.mxu0 0.0
    %1619 = vmatprep.subr.mxu0 0.0
    %1620 = vmatpush1.msra.mxu0 0.0
    %1621 = vmatprep.subr.mxu0 0.0
    %1622 = vmatpush1.msra.mxu0 0.0
    %1623 = vmatprep.subr.mxu0 0.0
    %1624 = vmatpush1.msra.mxu0 0.0
    %1625 = vmatprep.subr.mxu0 0.0
    %1626 = vmatpush1.msra.mxu0 0.0
    %1627 = vmatprep.subr.mxu0 0.0
    %1628 = vmatpush1.msra.mxu0 0.0
    %1629 = vmatprep.subr.mxu0 0.0
    %1630 = vmatpush1.msra.mxu0 0.0
    %1631 = vmatprep.subr.mxu0 0.0
    %1632 = vmatpush1.msra.mxu0 0.0
    %1633 = vmatprep.subr.mxu0 0.0
    %1634 = vmatpush1.msra.mxu0 0.0
    %1635 = vmatprep.subr.mxu0 0.0
    %1636 = vmatpush1.msra.mxu0 0.0
    %1637 = vmatprep.subr.mxu0 0.0
    %1638 = vmatpush1.msra.mxu0 0.0
    %1639 = vmatprep.subr.mxu0 0.0
    %1640 = vmatpush1.msra.mxu0 0.0
    %1641 = vmatprep.subr.mxu0 0.0
    %1642 = vmatpush1.msra.mxu0 0.0
    %1643 = vmatprep.subr.mxu0 0.0
    %1644 = vmatpush1.msra.mxu0 0.0
    %1645 = vmatprep.subr.mxu0 0.0
    %1646 = vmatpush1.msra.mxu0 0.0
    %1647 = vmatprep.subr.mxu0 0.0
    %1648 = vmatpush1.msra.mxu0 0.0
    %1649 = vmatprep.subr.mxu0 0.0
    %1650 = vmatpush1.msra.mxu0 0.0
    %1651 = vmatprep.subr.mxu0 0.0
    %1652 = vmatpush1.msra.mxu0 0.0
    %1653 = vmatprep.subr.mxu0 0.0
    %1654 = vmatpush1.msra.mxu0 0.0
    %1655 = vmatprep.subr.mxu0 0.0
    %1656 = vmatpush1.msra.mxu0 0.0
    %1657 = vmatprep.subr.mxu0 0.0
    %1658 = vmatpush1.msra.mxu0 0.0
    %1659 = vmatprep.mubr.f32.mxu0 0.0
    %1660 = vmatmul.mubr.f32.gmra.mrb[0].mxu0 %v419
    %v1661 = vpop.f32.mrb[0].mxu0
    %v1662 = vadd.f32 0.0, %v1661
    %v1663 = vpop.f32.mrb[0].mxu0
    %1664 = vmatprep.mubr.f32.mxu0 0.0
    %1665 = vmatmul.mubr.f32.gmra.mrb[0].mxu0 %v422
    %v1666 = vpop.f32.mrb[0].mxu0
    %v1667 = vadd.f32 0.0, %v1666
    %v1668 = vpop.f32.mrb[0].mxu0
    %1669 = vmatprep.mubr.f32.mxu0 0.0
    %1670 = vmatmul.mubr.f32.gmra.mrb[0].mxu0 %v425
    %v1671 = vpop.f32.mrb[0].mxu0
    %v1672 = vadd.f32 0.0, %v1671
    %v1673 = vpop.f32.mrb[0].mxu0
    %1674 = vmatprep.mubr.f32.mxu0 0.0
    %1675 = vmatmul.mubr.f32.gmra.mrb[0].mxu0 %v428
    %v1676 = vpop.f32.mrb[0].mxu0
    %v1677 = vadd.f32 0.0, %v1676
    %v1678 = vpop.f32.mrb[0].mxu0
    %1679 = vmatprep.mubr.f32.mxu0 0.0
    %1680 = vmatmul.mubr.f32.gmra.mrb[0].mxu0 %v431
    %v1681 = vpop.f32.mrb[0].mxu0
    %v1682 = vadd.f32 0.0, %v1681
    %v1683 = vpop.f32.mrb[0].mxu0
    %1684 = vmatprep.mubr.f32.mxu0 0.0
    %1685 = vmatmul.mubr.f32.gmra.mrb[0].mxu0 %v434
    %v1686 = vpop.f32.mrb[0].mxu0
    %v1687 = vadd.f32 0.0, %v1686
    %v1688 = vpop.f32.mrb[0].mxu0
    %1689 = vmatprep.mubr.f32.mxu0 0.0
    %1690 = vmatmul.mubr.f32.gmra.mrb[0].mxu0 %v437
    %v1691 = vpop.f32.mrb[0].mxu0
    %v1692 = vadd.f32 0.0, %v1691
    %v1693 = vpop.f32.mrb[0].mxu0
    %1694 = vmatprep.mubr.f32.mxu0 0.0
    %1695 = vmatmul.mubr.f32.gmra.mrb[0].mxu0 %v440
    %v1696 = vpop.f32.mrb[0].mxu0
    %v1697 = vadd.f32 0.0, %v1696
    %v1698 = vpop.f32.mrb[0].mxu0
    %1699 = vdwg.mxu0
    %v1700 = vmul.f32 %v1662, %v183
    %v1701 = vmul.f32 %v1667, %v184
    %v1702 = vmul.f32 %v1672, %v185
    %v1703 = vmul.f32 %v1677, %v186
    %v1704 = vmul.f32 %v1682, %v187
    %v1705 = vmul.f32 %v1687, %v188
    %v1706 = vmul.f32 %v1692, %v189
    %v1707 = vmul.f32 %v1697, %v190
    %v1708 = vsel %vm212, %v1466, 0
    %v1710 = vsel %vm212, %v1467, 0
    %v1713 = vsel %vm212, %v1581, 0
    %v1716 = vsel %vm212, %v1582, 0
    %v1719 = vsel %vm212, %v1583, 0
    %v1722 = vsel %vm212, %v1584, 0
    %v1725 = vsel %vm212, %v1585, 0
    %v1728 = vsel %vm212, %v1586, 0
    %v1731 = vsel %vm212, %v1587, 0
    %v1734 = vsel %vm212, %v1588, 0
    %1736 = vmatprep.subr.mxu0 0.0
    %1737 = vmatpush1.xpose.msra.mxu0 %v1713
    %1738 = vmatprep.subr.mxu0 0.0
    %1739 = vmatpush1.xpose.msra.mxu0 %v1716
    %1740 = vmatprep.subr.mxu0 0.0
    %1741 = vmatpush1.xpose.msra.mxu0 %v1719
    %1742 = vmatprep.subr.mxu0 0.0
    %1743 = vmatpush1.xpose.msra.mxu0 %v1722
    %1744 = vmatprep.subr.mxu0 0.0
    %1745 = vmatpush1.xpose.msra.mxu0 %v1725
    %1746 = vmatprep.subr.mxu0 0.0
    %1747 = vmatpush1.xpose.msra.mxu0 %v1728
    %1748 = vmatprep.subr.mxu0 0.0
    %1749 = vmatpush1.xpose.msra.mxu0 %v1731
    %1750 = vmatprep.subr.mxu0 0.0
    %1751 = vmatpush1.xpose.msra.mxu0 %v1734
    %1752 = vmatprep.subr.mxu0 0.0
    %1753 = vmatpush1.xpose.msra.mxu0 0.0
    %1754 = vmatprep.subr.mxu0 0.0
    %1755 = vmatpush1.xpose.msra.mxu0 0.0
    %1756 = vmatprep.subr.mxu0 0.0
    %1757 = vmatpush1.xpose.msra.mxu0 0.0
    %1758 = vmatprep.subr.mxu0 0.0
    %1759 = vmatpush1.xpose.msra.mxu0 0.0
    %1760 = vmatprep.subr.mxu0 0.0
    %1761 = vmatpush1.xpose.msra.mxu0 0.0
    %1762 = vmatprep.subr.mxu0 0.0
    %1763 = vmatpush1.xpose.msra.mxu0 0.0
    %1764 = vmatprep.subr.mxu0 0.0
    %1765 = vmatpush1.xpose.msra.mxu0 0.0
    %1766 = vmatprep.subr.mxu0 0.0
    %1767 = vmatpush1.xpose.msra.mxu0 0.0
    %1768 = vmatprep.subr.mxu0 0.0
    %1769 = vmatpush1.xpose.msra.mxu0 0.0
    %1770 = vmatprep.subr.mxu0 0.0
    %1771 = vmatpush1.xpose.msra.mxu0 0.0
    %1772 = vmatprep.subr.mxu0 0.0
    %1773 = vmatpush1.xpose.msra.mxu0 0.0
    %1774 = vmatprep.subr.mxu0 0.0
    %1775 = vmatpush1.xpose.msra.mxu0 0.0
    %1776 = vmatprep.subr.mxu0 0.0
    %1777 = vmatpush1.xpose.msra.mxu0 0.0
    %1778 = vmatprep.subr.mxu0 0.0
    %1779 = vmatpush1.xpose.msra.mxu0 0.0
    %1780 = vmatprep.subr.mxu0 0.0
    %1781 = vmatpush1.xpose.msra.mxu0 0.0
    %1782 = vmatprep.subr.mxu0 0.0
    %1783 = vmatpush1.xpose.msra.mxu0 0.0
    %1784 = vmatprep.subr.mxu0 0.0
    %1785 = vmatpush1.xpose.msra.mxu0 0.0
    %1786 = vmatprep.subr.mxu0 0.0
    %1787 = vmatpush1.xpose.msra.mxu0 0.0
    %1788 = vmatprep.subr.mxu0 0.0
    %1789 = vmatpush1.xpose.msra.mxu0 0.0
    %1790 = vmatprep.subr.mxu0 0.0
    %1791 = vmatpush1.xpose.msra.mxu0 0.0
    %1792 = vmatprep.subr.mxu0 0.0
    %1793 = vmatpush1.xpose.msra.mxu0 0.0
    %1794 = vmatprep.subr.mxu0 0.0
    %1795 = vmatpush1.xpose.msra.mxu0 0.0
    %1796 = vmatprep.subr.mxu0 0.0
    %1797 = vmatpush1.xpose.msra.mxu0 0.0
    %1798 = vmatprep.subr.mxu0 0.0
    %1799 = vmatpush1.xpose.msra.mxu0 0.0
    %1800 = vmatprep.mubr.f32.mxu0 0.0
    %1801 = vmatmul.mubr.f32.gmra.mrb[0].mxu0 %v1708
    %v1802 = vpop.f32.mrb[0].mxu0
    %v1803 = vadd.f32 0.0, %v1802
    %v1804 = vpop.f32.mrb[0].mxu0
    %1805 = vmatprep.mubr.f32.mxu0 0.0
    %1806 = vmatmul.mubr.f32.gmra.mrb[0].mxu0 %v1710
    %v1807 = vpop.f32.mrb[0].mxu0
    %v1808 = vadd.f32 0.0, %v1807
    %v1809 = vpop.f32.mrb[0].mxu0
    %1810 = vdwg.mxu0
    %v1811 = vmul.f32 %v1803, 0.35355338
    %v1812 = vmul.f32 %v1808, 0.35355338
    %v1813 = vadd.f32 %v1811, %v199
    %v1814 = vadd.f32 %v1812, %v200
    %v1815 = vsel %vm323, %v1813, -inf
    %1816 = vmax.xlane.f32.xlu0 %v1815
    %v1817 = vpop.xlane.xlu0 %1816
    %v1818 = vsel %vm323, %v1814, -inf
    %1819 = vmax.xlane.f32.xlu0 %v1818
    %v1820 = vpop.xlane.xlu0 %1819
    %v1821 = vsub.f32 %v1813, %v1817
    %v1822 = vsub.f32 %v1814, %v1820
    %v1823 = vmul.f32 %v1821, 1.442695
    %v1824 = vpow.pop %v1823
    %v1825 = vmul.f32 %v1822, 1.442695
    %v1826 = vpow.pop %v1825
    %v1828 = vsel %vm323, %v1824, 0
    %v1831 = vsel %vm323, %v1826, 0
    %1833 = vmatprep.subr.mxu0 0.0
    %1834 = vmatpush1.msra.mxu0 %v191
    %1835 = vmatprep.subr.mxu0 0.0
    %1836 = vmatpush1.msra.mxu0 %v192
    %1837 = vmatprep.subr.mxu0 0.0
    %1838 = vmatpush1.msra.mxu0 %v193
    %1839 = vmatprep.subr.mxu0 0.0
    %1840 = vmatpush1.msra.mxu0 %v194
    %1841 = vmatprep.subr.mxu0 0.0
    %1842 = vmatpush1.msra.mxu0 %v195
    %1843 = vmatprep.subr.mxu0 0.0
    %1844 = vmatpush1.msra.mxu0 %v196
    %1845 = vmatprep.subr.mxu0 0.0
    %1846 = vmatpush1.msra.mxu0 %v197
    %1847 = vmatprep.subr.mxu0 0.0
    %1848 = vmatpush1.msra.mxu0 %v198
    %1849 = vmatprep.subr.mxu0 0.0
    %1850 = vmatpush1.msra.mxu0 0.0
    %1851 = vmatprep.subr.mxu0 0.0
    %1852 = vmatpush1.msra.mxu0 0.0
    %1853 = vmatprep.subr.mxu0 0.0
    %1854 = vmatpush1.msra.mxu0 0.0
    %1855 = vmatprep.subr.mxu0 0.0
    %1856 = vmatpush1.msra.mxu0 0.0
    %1857 = vmatprep.subr.mxu0 0.0
    %1858 = vmatpush1.msra.mxu0 0.0
    %1859 = vmatprep.subr.mxu0 0.0
    %1860 = vmatpush1.msra.mxu0 0.0
    %1861 = vmatprep.subr.mxu0 0.0
    %1862 = vmatpush1.msra.mxu0 0.0
    %1863 = vmatprep.subr.mxu0 0.0
    %1864 = vmatpush1.msra.mxu0 0.0
    %1865 = vmatprep.subr.mxu0 0.0
    %1866 = vmatpush1.msra.mxu0 0.0
    %1867 = vmatprep.subr.mxu0 0.0
    %1868 = vmatpush1.msra.mxu0 0.0
    %1869 = vmatprep.subr.mxu0 0.0
    %1870 = vmatpush1.msra.mxu0 0.0
    %1871 = vmatprep.subr.mxu0 0.0
    %1872 = vmatpush1.msra.mxu0 0.0
    %1873 = vmatprep.subr.mxu0 0.0
    %1874 = vmatpush1.msra.mxu0 0.0
    %1875 = vmatprep.subr.mxu0 0.0
    %1876 = vmatpush1.msra.mxu0 0.0
    %1877 = vmatprep.subr.mxu0 0.0
    %1878 = vmatpush1.msra.mxu0 0.0
    %1879 = vmatprep.subr.mxu0 0.0
    %1880 = vmatpush1.msra.mxu0 0.0
    %1881 = vmatprep.subr.mxu0 0.0
    %1882 = vmatpush1.msra.mxu0 0.0
    %1883 = vmatprep.subr.mxu0 0.0
    %1884 = vmatpush1.msra.mxu0 0.0
    %1885 = vmatprep.subr.mxu0 0.0
    %1886 = vmatpush1.msra.mxu0 0.0
    %1887 = vmatprep.subr.mxu0 0.0
    %1888 = vmatpush1.msra.mxu0 0.0
    %1889 = vmatprep.subr.mxu0 0.0
    %1890 = vmatpush1.msra.mxu0 0.0
    %1891 = vmatprep.subr.mxu0 0.0
    %1892 = vmatpush1.msra.mxu0 0.0
    %1893 = vmatprep.subr.mxu0 0.0
    %1894 = vmatpush1.msra.mxu0 0.0
    %1895 = vmatprep.subr.mxu0 0.0
    %1896 = vmatpush1.msra.mxu0 0.0
    %1897 = vmatprep.mubr.f32.mxu0 0.0
    %1898 = vmatmul.mubr.f32.gmra.mrb[0].mxu0 %v1828
    %v1899 = vpop.f32.mrb[0].mxu0
    %v1900 = vadd.f32 0.0, %v1899
    %v1901 = vpop.f32.mrb[0].mxu0
    %1902 = vmatprep.mubr.f32.mxu0 0.0
    %1903 = vmatmul.mubr.f32.gmra.mrb[0].mxu0 %v1831
    %v1904 = vpop.f32.mrb[0].mxu0
    %v1905 = vadd.f32 0.0, %v1904
    %v1906 = vpop.f32.mrb[0].mxu0
    %1907 = vdwg.mxu0
    %v1908 = vmax.f32 %v1900, 1e-30
    %v1909 = vmax.f32 %v1905, 1e-30
    %v1910 = vrcp.pop %v1908
    %v1911 = vrcp.pop %v1909
    %v1912 = vmul.f32 %v1824, %v1910
    %v1913 = vmul.f32 %v1826, %v1911
    %v1915 = vsel %vm323, %v1912, 0
    %v1918 = vsel %vm323, %v1913, 0
    %1920 = vmatprep.subr.mxu0 0.0
    %1921 = vmatpush1.msra.mxu0 %v1700
    %1922 = vmatprep.subr.mxu0 0.0
    %1923 = vmatpush1.msra.mxu0 %v1701
    %1924 = vmatprep.subr.mxu0 0.0
    %1925 = vmatpush1.msra.mxu0 %v1702
    %1926 = vmatprep.subr.mxu0 0.0
    %1927 = vmatpush1.msra.mxu0 %v1703
    %1928 = vmatprep.subr.mxu0 0.0
    %1929 = vmatpush1.msra.mxu0 %v1704
    %1930 = vmatprep.subr.mxu0 0.0
    %1931 = vmatpush1.msra.mxu0 %v1705
    %1932 = vmatprep.subr.mxu0 0.0
    %1933 = vmatpush1.msra.mxu0 %v1706
    %1934 = vmatprep.subr.mxu0 0.0
    %1935 = vmatpush1.msra.mxu0 %v1707
    %1936 = vmatprep.subr.mxu0 0.0
    %1937 = vmatpush1.msra.mxu0 0.0
    %1938 = vmatprep.subr.mxu0 0.0
    %1939 = vmatpush1.msra.mxu0 0.0
    %1940 = vmatprep.subr.mxu0 0.0
    %1941 = vmatpush1.msra.mxu0 0.0
    %1942 = vmatprep.subr.mxu0 0.0
    %1943 = vmatpush1.msra.mxu0 0.0
    %1944 = vmatprep.subr.mxu0 0.0
    %1945 = vmatpush1.msra.mxu0 0.0
    %1946 = vmatprep.subr.mxu0 0.0
    %1947 = vmatpush1.msra.mxu0 0.0
    %1948 = vmatprep.subr.mxu0 0.0
    %1949 = vmatpush1.msra.mxu0 0.0
    %1950 = vmatprep.subr.mxu0 0.0
    %1951 = vmatpush1.msra.mxu0 0.0
    %1952 = vmatprep.subr.mxu0 0.0
    %1953 = vmatpush1.msra.mxu0 0.0
    %1954 = vmatprep.subr.mxu0 0.0
    %1955 = vmatpush1.msra.mxu0 0.0
    %1956 = vmatprep.subr.mxu0 0.0
    %1957 = vmatpush1.msra.mxu0 0.0
    %1958 = vmatprep.subr.mxu0 0.0
    %1959 = vmatpush1.msra.mxu0 0.0
    %1960 = vmatprep.subr.mxu0 0.0
    %1961 = vmatpush1.msra.mxu0 0.0
    %1962 = vmatprep.subr.mxu0 0.0
    %1963 = vmatpush1.msra.mxu0 0.0
    %1964 = vmatprep.subr.mxu0 0.0
    %1965 = vmatpush1.msra.mxu0 0.0
    %1966 = vmatprep.subr.mxu0 0.0
    %1967 = vmatpush1.msra.mxu0 0.0
    %1968 = vmatprep.subr.mxu0 0.0
    %1969 = vmatpush1.msra.mxu0 0.0
    %1970 = vmatprep.subr.mxu0 0.0
    %1971 = vmatpush1.msra.mxu0 0.0
    %1972 = vmatprep.subr.mxu0 0.0
    %1973 = vmatpush1.msra.mxu0 0.0
    %1974 = vmatprep.subr.mxu0 0.0
    %1975 = vmatpush1.msra.mxu0 0.0
    %1976 = vmatprep.subr.mxu0 0.0
    %1977 = vmatpush1.msra.mxu0 0.0
    %1978 = vmatprep.subr.mxu0 0.0
    %1979 = vmatpush1.msra.mxu0 0.0
    %1980 = vmatprep.subr.mxu0 0.0
    %1981 = vmatpush1.msra.mxu0 0.0
    %1982 = vmatprep.subr.mxu0 0.0
    %1983 = vmatpush1.msra.mxu0 0.0
    %1984 = vmatprep.mubr.f32.mxu0 0.0
    %1985 = vmatmul.mubr.f32.gmra.mrb[0].mxu0 %v1915
    %v1986 = vpop.f32.mrb[0].mxu0
    %v1987 = vadd.f32 0.0, %v1986
    %v1988 = vpop.f32.mrb[0].mxu0
    %1989 = vmatprep.mubr.f32.mxu0 0.0
    %1990 = vmatmul.mubr.f32.gmra.mrb[0].mxu0 %v1918
    %v1991 = vpop.f32.mrb[0].mxu0
    %v1992 = vadd.f32 0.0, %v1991
    %v1993 = vpop.f32.mrb[0].mxu0
    %1994 = vdwg.mxu0
    %s1995 = scalar_lea.vmem [#allocation10], 32
    %v1996 = vld [vmem:[%s1995] sm:$0xff]
    %v1997 = vld [vmem:[%s1995 + $0x8] sm:$0xff]
    %v1998 = vld [vmem:[%s1995 + $0x10] sm:$0xff]
    %v1999 = vld [vmem:[%s1995 + $0x18] sm:$0xff]
    %v2001 = vsel %vm212, %v1987, 0
    %v2004 = vsel %vm212, %v1992, 0
    %2006 = vmatprep.subr.mxu0 0.0
    %2007 = vmatpush1.msra.mxu0 %v1996
    %2008 = vmatprep.subr.mxu0 0.0
    %2009 = vmatpush1.msra.mxu0 %v1997
    %2010 = vmatprep.subr.mxu0 0.0
    %2011 = vmatpush1.msra.mxu0 %v1998
    %2012 = vmatprep.subr.mxu0 0.0
    %2013 = vmatpush1.msra.mxu0 %v1999
    %2014 = vmatprep.subr.mxu0 0.0
    %2015 = vmatpush1.msra.mxu0 0.0
    %2016 = vmatprep.subr.mxu0 0.0
    %2017 = vmatpush1.msra.mxu0 0.0
    %2018 = vmatprep.subr.mxu0 0.0
    %2019 = vmatpush1.msra.mxu0 0.0
    %2020 = vmatprep.subr.mxu0 0.0
    %2021 = vmatpush1.msra.mxu0 0.0
    %2022 = vmatprep.subr.mxu0 0.0
    %2023 = vmatpush1.msra.mxu0 0.0
    %2024 = vmatprep.subr.mxu0 0.0
    %2025 = vmatpush1.msra.mxu0 0.0
    %2026 = vmatprep.subr.mxu0 0.0
    %2027 = vmatpush1.msra.mxu0 0.0
    %2028 = vmatprep.subr.mxu0 0.0
    %2029 = vmatpush1.msra.mxu0 0.0
    %2030 = vmatprep.subr.mxu0 0.0
    %2031 = vmatpush1.msra.mxu0 0.0
    %2032 = vmatprep.subr.mxu0 0.0
    %2033 = vmatpush1.msra.mxu0 0.0
    %2034 = vmatprep.subr.mxu0 0.0
    %2035 = vmatpush1.msra.mxu0 0.0
    %2036 = vmatprep.subr.mxu0 0.0
    %2037 = vmatpush1.msra.mxu0 0.0
    %2038 = vmatprep.subr.mxu0 0.0
    %2039 = vmatpush1.msra.mxu0 0.0
    %2040 = vmatprep.subr.mxu0 0.0
    %2041 = vmatpush1.msra.mxu0 0.0
    %2042 = vmatprep.subr.mxu0 0.0
    %2043 = vmatpush1.msra.mxu0 0.0
    %2044 = vmatprep.subr.mxu0 0.0
    %2045 = vmatpush1.msra.mxu0 0.0
    %2046 = vmatprep.subr.mxu0 0.0
    %2047 = vmatpush1.msra.mxu0 0.0
    %2048 = vmatprep.subr.mxu0 0.0
    %2049 = vmatpush1.msra.mxu0 0.0
    %2050 = vmatprep.subr.mxu0 0.0
    %2051 = vmatpush1.msra.mxu0 0.0
    %2052 = vmatprep.subr.mxu0 0.0
    %2053 = vmatpush1.msra.mxu0 0.0
    %2054 = vmatprep.subr.mxu0 0.0
    %2055 = vmatpush1.msra.mxu0 0.0
    %2056 = vmatprep.subr.mxu0 0.0
    %2057 = vmatpush1.msra.mxu0 0.0
    %2058 = vmatprep.subr.mxu0 0.0
    %2059 = vmatpush1.msra.mxu0 0.0
    %2060 = vmatprep.subr.mxu0 0.0
    %2061 = vmatpush1.msra.mxu0 0.0
    %2062 = vmatprep.subr.mxu0 0.0
    %2063 = vmatpush1.msra.mxu0 0.0
    %2064 = vmatprep.subr.mxu0 0.0
    %2065 = vmatpush1.msra.mxu0 0.0
    %2066 = vmatprep.subr.mxu0 0.0
    %2067 = vmatpush1.msra.mxu0 0.0
    %2068 = vmatprep.subr.mxu0 0.0
    %2069 = vmatpush1.msra.mxu0 0.0
    %2070 = vmatprep.mubr.f32.mxu0 0.0
    %2071 = vmatmul.mubr.f32.gmra.mrb[0].mxu0 %v2001
    %v2072 = vpop.f32.mrb[0].mxu0
    %v2073 = vadd.f32 0.0, %v2072
    %v2074 = vpop.f32.mrb[0].mxu0
    %2075 = vmatprep.mubr.f32.mxu0 0.0
    %2076 = vmatmul.mubr.f32.gmra.mrb[0].mxu0 %v2004
    %v2077 = vpop.f32.mrb[0].mxu0
    %v2078 = vadd.f32 0.0, %v2077
    %v2079 = vpop.f32.mrb[0].mxu0
    %2080 = vdwg.mxu0
    %v2081 = vadd.f32 %v1267, %v2073
    %v2082 = vadd.f32 %v1268, %v2078
    %s2083 = scalar_lea.vmem %s12, 1
    %v2084 = vld [vmem:[%s2083] sm:$0x1]
    %v2085 = vmul.f32 %v2081, %v2081
    %v2086 = vmul.f32 %v2082, %v2082
    %v2087 = vsel %vm212, %v2085, 0.0
    %2088 = vadd.xlane.f32.xlu0 %v2087
    %v2089 = vpop.xlane.xlu0 %2088
    %v2090 = vsel %vm212, %v2086, 0.0
    %2091 = vadd.xlane.f32.xlu0 %v2090
    %v2092 = vpop.xlane.xlu0 %2091
    %v2093 = vmul.f32 %v2089, %v219
    %v2094 = vmul.f32 %v2092, %v219
    %v2095 = vadd.f32 %v2093, 1e-06
    %v2096 = vadd.f32 %v2094, 1e-06
    %v2097 = vrsqrt.pop %v2095
    %v2098 = vrsqrt.pop %v2096
    %v2099 = vmul.f32 %v2081, %v2097
    %v2100 = vmul.f32 %v2082, %v2098
    %v2102 = vlaneseq
    %v2103 = vshrl.u32 %v2102, 7
    %v2104 = vsub.s32 0, %v2103
    %v2105 = vrot.slane %v2084, %v2104
    %v2107 = vmul.f32 %v2099, %v2105
    %v2108 = vmul.f32 %v2100, %v2105
    %s2109 = scalar_lea.vmem [#allocation11], 32
    %v2110 = vld [vmem:[%s2109] sm:$0xff]
    %v2111 = vld [vmem:[%s2109 + $0x8] sm:$0xff]
    %v2112 = vld [vmem:[%s2109 + $0x10] sm:$0xff]
    %v2113 = vld [vmem:[%s2109 + $0x18] sm:$0xff]
    %v2115 = vsel %vm212, %v2107, 0
    %v2118 = vsel %vm212, %v2108, 0
    %2120 = vmatprep.subr.mxu0 0.0
    %2121 = vmatpush1.msra.mxu0 %v2110
    %2122 = vmatprep.subr.mxu0 0.0
    %2123 = vmatpush1.msra.mxu0 %v2111
    %2124 = vmatprep.subr.mxu0 0.0
    %2125 = vmatpush1.msra.mxu0 %v2112
    %2126 = vmatprep.subr.mxu0 0.0
    %2127 = vmatpush1.msra.mxu0 %v2113
    %2128 = vmatprep.subr.mxu0 0.0
    %2129 = vmatpush1.msra.mxu0 0.0
    %2130 = vmatprep.subr.mxu0 0.0
    %2131 = vmatpush1.msra.mxu0 0.0
    %2132 = vmatprep.subr.mxu0 0.0
    %2133 = vmatpush1.msra.mxu0 0.0
    %2134 = vmatprep.subr.mxu0 0.0
    %2135 = vmatpush1.msra.mxu0 0.0
    %2136 = vmatprep.subr.mxu0 0.0
    %2137 = vmatpush1.msra.mxu0 0.0
    %2138 = vmatprep.subr.mxu0 0.0
    %2139 = vmatpush1.msra.mxu0 0.0
    %2140 = vmatprep.subr.mxu0 0.0
    %2141 = vmatpush1.msra.mxu0 0.0
    %2142 = vmatprep.subr.mxu0 0.0
    %2143 = vmatpush1.msra.mxu0 0.0
    %2144 = vmatprep.subr.mxu0 0.0
    %2145 = vmatpush1.msra.mxu0 0.0
    %2146 = vmatprep.subr.mxu0 0.0
    %2147 = vmatpush1.msra.mxu0 0.0
    %2148 = vmatprep.subr.mxu0 0.0
    %2149 = vmatpush1.msra.mxu0 0.0
    %2150 = vmatprep.subr.mxu0 0.0
    %2151 = vmatpush1.msra.mxu0 0.0
    %2152 = vmatprep.subr.mxu0 0.0
    %2153 = vmatpush1.msra.mxu0 0.0
    %2154 = vmatprep.subr.mxu0 0.0
    %2155 = vmatpush1.msra.mxu0 0.0
    %2156 = vmatprep.subr.mxu0 0.0
    %2157 = vmatpush1.msra.mxu0 0.0
    %2158 = vmatprep.subr.mxu0 0.0
    %2159 = vmatpush1.msra.mxu0 0.0
    %2160 = vmatprep.subr.mxu0 0.0
    %2161 = vmatpush1.msra.mxu0 0.0
    %2162 = vmatprep.subr.mxu0 0.0
    %2163 = vmatpush1.msra.mxu0 0.0
    %2164 = vmatprep.subr.mxu0 0.0
    %2165 = vmatpush1.msra.mxu0 0.0
    %2166 = vmatprep.subr.mxu0 0.0
    %2167 = vmatpush1.msra.mxu0 0.0
    %2168 = vmatprep.subr.mxu0 0.0
    %2169 = vmatpush1.msra.mxu0 0.0
    %2170 = vmatprep.subr.mxu0 0.0
    %2171 = vmatpush1.msra.mxu0 0.0
    %2172 = vmatprep.subr.mxu0 0.0
    %2173 = vmatpush1.msra.mxu0 0.0
    %2174 = vmatprep.subr.mxu0 0.0
    %2175 = vmatpush1.msra.mxu0 0.0
    %2176 = vmatprep.subr.mxu0 0.0
    %2177 = vmatpush1.msra.mxu0 0.0
    %2178 = vmatprep.subr.mxu0 0.0
    %2179 = vmatpush1.msra.mxu0 0.0
    %2180 = vmatprep.subr.mxu0 0.0
    %2181 = vmatpush1.msra.mxu0 0.0
    %2182 = vmatprep.subr.mxu0 0.0
    %2183 = vmatpush1.msra.mxu0 0.0
    %2184 = vmatprep.mubr.f32.mxu0 0.0
    %2185 = vmatmul.mubr.f32.gmra.mrb[0].mxu0 %v2115
    %v2186 = vpop.f32.mrb[0].mxu0
    %v2187 = vadd.f32 0.0, %v2186
    %v2188 = vpop.f32.mrb[0].mxu0
    %2189 = vmatprep.mubr.f32.mxu0 0.0
    %2190 = vmatmul.mubr.f32.gmra.mrb[0].mxu0 %v2118
    %v2191 = vpop.f32.mrb[0].mxu0
    %v2192 = vadd.f32 0.0, %v2191
    %v2193 = vpop.f32.mrb[0].mxu0
    %2194 = vdwg.mxu0
    %v2195 = vxor.u32 %v2187, 2147483648
    %v2196 = vxor.u32 %v2192, 2147483648
    %v2197 = vmul.f32 %v2195, 1.442695
    %v2198 = vpow.pop %v2197
    %v2199 = vmul.f32 %v2196, 1.442695
    %v2200 = vpow.pop %v2199
    %v2201 = vadd.f32 %v2198, 1.0
    %v2202 = vadd.f32 %v2200, 1.0
    %v2203 = vrcp.pop %v2201
    %v2204 = vmul.f32 1.0, %v2203
    %v2205 = vrcp.pop %v2202
    %v2206 = vmul.f32 1.0, %v2205
    %v2207 = vmul.f32 %v2187, %v2204
    %v2208 = vmul.f32 %v2192, %v2206
    %2211 = vrot.lane.b32.xlu0 %v2207, 96
    %v2212 = vpop.permute.xlu0 %2211
    %2213 = vrot.lane.b32.xlu0 %v2208, 96
    %v2214 = vpop.permute.xlu0 %2213
    %v2217 = vmul.f32 %v2187, %v2212
    %v2218 = vmul.f32 %v2192, %v2214
    %s2219 = scalar_lea.vmem [#allocation13], 32
    %v2220 = vld [vmem:[%s2219] sm:$0xff]
    %v2221 = vld [vmem:[%s2219 + $0x8] sm:$0xff]
    %v2222 = vld [vmem:[%s2219 + $0x10] sm:$0xff]
    %v2223 = vld [vmem:[%s2219 + $0x18] sm:$0xff]
    %v2225 = vsel %vm212, %v2217, 0
    %v2228 = vsel %vm212, %v2218, 0
    %2230 = vmatprep.subr.mxu0 0.0
    %2231 = vmatpush1.msra.mxu0 %v2220
    %2232 = vmatprep.subr.mxu0 0.0
    %2233 = vmatpush1.msra.mxu0 %v2221
    %2234 = vmatprep.subr.mxu0 0.0
    %2235 = vmatpush1.msra.mxu0 %v2222
    %2236 = vmatprep.subr.mxu0 0.0
    %2237 = vmatpush1.msra.mxu0 %v2223
    %2238 = vmatprep.subr.mxu0 0.0
    %2239 = vmatpush1.msra.mxu0 0.0
    %2240 = vmatprep.subr.mxu0 0.0
    %2241 = vmatpush1.msra.mxu0 0.0
    %2242 = vmatprep.subr.mxu0 0.0
    %2243 = vmatpush1.msra.mxu0 0.0
    %2244 = vmatprep.subr.mxu0 0.0
    %2245 = vmatpush1.msra.mxu0 0.0
    %2246 = vmatprep.subr.mxu0 0.0
    %2247 = vmatpush1.msra.mxu0 0.0
    %2248 = vmatprep.subr.mxu0 0.0
    %2249 = vmatpush1.msra.mxu0 0.0
    %2250 = vmatprep.subr.mxu0 0.0
    %2251 = vmatpush1.msra.mxu0 0.0
    %2252 = vmatprep.subr.mxu0 0.0
    %2253 = vmatpush1.msra.mxu0 0.0
    %2254 = vmatprep.subr.mxu0 0.0
    %2255 = vmatpush1.msra.mxu0 0.0
    %2256 = vmatprep.subr.mxu0 0.0
    %2257 = vmatpush1.msra.mxu0 0.0
    %2258 = vmatprep.subr.mxu0 0.0
    %2259 = vmatpush1.msra.mxu0 0.0
    %2260 = vmatprep.subr.mxu0 0.0
    %2261 = vmatpush1.msra.mxu0 0.0
    %2262 = vmatprep.subr.mxu0 0.0
    %2263 = vmatpush1.msra.mxu0 0.0
    %2264 = vmatprep.subr.mxu0 0.0
    %2265 = vmatpush1.msra.mxu0 0.0
    %2266 = vmatprep.subr.mxu0 0.0
    %2267 = vmatpush1.msra.mxu0 0.0
    %2268 = vmatprep.subr.mxu0 0.0
    %2269 = vmatpush1.msra.mxu0 0.0
    %2270 = vmatprep.subr.mxu0 0.0
    %2271 = vmatpush1.msra.mxu0 0.0
    %2272 = vmatprep.subr.mxu0 0.0
    %2273 = vmatpush1.msra.mxu0 0.0
    %2274 = vmatprep.subr.mxu0 0.0
    %2275 = vmatpush1.msra.mxu0 0.0
    %2276 = vmatprep.subr.mxu0 0.0
    %2277 = vmatpush1.msra.mxu0 0.0
    %2278 = vmatprep.subr.mxu0 0.0
    %2279 = vmatpush1.msra.mxu0 0.0
    %2280 = vmatprep.subr.mxu0 0.0
    %2281 = vmatpush1.msra.mxu0 0.0
    %2282 = vmatprep.subr.mxu0 0.0
    %2283 = vmatpush1.msra.mxu0 0.0
    %2284 = vmatprep.subr.mxu0 0.0
    %2285 = vmatpush1.msra.mxu0 0.0
    %2286 = vmatprep.subr.mxu0 0.0
    %2287 = vmatpush1.msra.mxu0 0.0
    %2288 = vmatprep.subr.mxu0 0.0
    %2289 = vmatpush1.msra.mxu0 0.0
    %2290 = vmatprep.subr.mxu0 0.0
    %2291 = vmatpush1.msra.mxu0 0.0
    %2292 = vmatprep.subr.mxu0 0.0
    %2293 = vmatpush1.msra.mxu0 0.0
    %2294 = vmatprep.mubr.f32.mxu0 0.0
    %2295 = vmatmul.mubr.f32.gmra.mrb[0].mxu0 %v2225
    %v2296 = vpop.f32.mrb[0].mxu0
    %v2297 = vadd.f32 0.0, %v2296
    %v2298 = vpop.f32.mrb[0].mxu0
    %2299 = vmatprep.mubr.f32.mxu0 0.0
    %2300 = vmatmul.mubr.f32.gmra.mrb[0].mxu0 %v2228
    %v2301 = vpop.f32.mrb[0].mxu0
    %v2302 = vadd.f32 0.0, %v2301
    %v2303 = vpop.f32.mrb[0].mxu0
    %2304 = vdwg.mxu0
    %v2305 = vadd.f32 %v2081, %v2297
    %v2306 = vadd.f32 %v2082, %v2302
    %v2307 = vld [vmem:[%s8] sm:$0x3]
    %v2309 = vsel %vm417, %v2307, 0
    %2311 = vmatprep.subr.mxu0 0.0
    %2312 = vmatpush1.msra.mxu0 %v2305
    %2313 = vmatprep.subr.mxu0 0.0
    %2314 = vmatpush1.msra.mxu0 %v2306
    %2315 = vmatprep.subr.mxu0 0.0
    %2316 = vmatpush1.msra.mxu0 0.0
    %2317 = vmatprep.subr.mxu0 0.0
    %2318 = vmatpush1.msra.mxu0 0.0
    %2319 = vmatprep.subr.mxu0 0.0
    %2320 = vmatpush1.msra.mxu0 0.0
    %2321 = vmatprep.subr.mxu0 0.0
    %2322 = vmatpush1.msra.mxu0 0.0
    %2323 = vmatprep.subr.mxu0 0.0
    %2324 = vmatpush1.msra.mxu0 0.0
    %2325 = vmatprep.subr.mxu0 0.0
    %2326 = vmatpush1.msra.mxu0 0.0
    %2327 = vmatprep.subr.mxu0 0.0
    %2328 = vmatpush1.msra.mxu0 0.0
    %2329 = vmatprep.subr.mxu0 0.0
    %2330 = vmatpush1.msra.mxu0 0.0
    %2331 = vmatprep.subr.mxu0 0.0
    %2332 = vmatpush1.msra.mxu0 0.0
    %2333 = vmatprep.subr.mxu0 0.0
    %2334 = vmatpush1.msra.mxu0 0.0
    %2335 = vmatprep.subr.mxu0 0.0
    %2336 = vmatpush1.msra.mxu0 0.0
    %2337 = vmatprep.subr.mxu0 0.0
    %2338 = vmatpush1.msra.mxu0 0.0
    %2339 = vmatprep.subr.mxu0 0.0
    %2340 = vmatpush1.msra.mxu0 0.0
    %2341 = vmatprep.subr.mxu0 0.0
    %2342 = vmatpush1.msra.mxu0 0.0
    %2343 = vmatprep.subr.mxu0 0.0
    %2344 = vmatpush1.msra.mxu0 0.0
    %2345 = vmatprep.subr.mxu0 0.0
    %2346 = vmatpush1.msra.mxu0 0.0
    %2347 = vmatprep.subr.mxu0 0.0
    %2348 = vmatpush1.msra.mxu0 0.0
    %2349 = vmatprep.subr.mxu0 0.0
    %2350 = vmatpush1.msra.mxu0 0.0
    %2351 = vmatprep.subr.mxu0 0.0
    %2352 = vmatpush1.msra.mxu0 0.0
    %2353 = vmatprep.subr.mxu0 0.0
    %2354 = vmatpush1.msra.mxu0 0.0
    %2355 = vmatprep.subr.mxu0 0.0
    %2356 = vmatpush1.msra.mxu0 0.0
    %2357 = vmatprep.subr.mxu0 0.0
    %2358 = vmatpush1.msra.mxu0 0.0
    %2359 = vmatprep.subr.mxu0 0.0
    %2360 = vmatpush1.msra.mxu0 0.0
    %2361 = vmatprep.subr.mxu0 0.0
    %2362 = vmatpush1.msra.mxu0 0.0
    %2363 = vmatprep.subr.mxu0 0.0
    %2364 = vmatpush1.msra.mxu0 0.0
    %2365 = vmatprep.subr.mxu0 0.0
    %2366 = vmatpush1.msra.mxu0 0.0
    %2367 = vmatprep.subr.mxu0 0.0
    %2368 = vmatpush1.msra.mxu0 0.0
    %2369 = vmatprep.subr.mxu0 0.0
    %2370 = vmatpush1.msra.mxu0 0.0
    %2371 = vmatprep.subr.mxu0 0.0
    %2372 = vmatpush1.msra.mxu0 0.0
    %2373 = vmatprep.subr.mxu0 0.0
    %2374 = vmatpush1.msra.mxu0 0.0
    %2375 = vmatprep.mubr.f32.mxu0 0.0
    %2376 = vmatmul.mubr.f32.gmra.mrb[0].mxu0 %v2309
    %v2377 = vpop.f32.mrb[0].mxu0
    %v2378 = vadd.f32 0.0, %v2377
    %v2379 = vpop.f32.mrb[0].mxu0
    %2380 = vdwg.mxu0
    %v2381 = vld [vmem:[%s15] sm:$0x1]
    %v2382 = vmul.f32 %v2378, %v2378
    %vm2383 = vcmask 254976
    %v2384 = vsel %vm2383, %v2382, 0.0
    %2385 = vadd.xlane.f32.xlu0 %v2384
    %v2386 = vpop.xlane.xlu0 %2385
    %v2387 = vmul.f32 %v2386, %v219
    %v2388 = vadd.f32 %v2387, 1e-06
    %v2389 = vrsqrt.pop %v2388
    %v2390 = vmul.f32 %v2378, %v2389
    %v2392 = vlaneseq
    %v2393 = vshrl.u32 %v2392, 7
    %v2394 = vsub.s32 0, %v2393
    %v2395 = vrot.slane %v2381, %v2394
    %v2397 = vmul.f32 %v2390, %v2395
    %v2398 = vld [vmem:[#allocation14] sm:$0xff]
    %v2399 = vld [vmem:[#allocation14 + $0x8] sm:$0xff]
    %v2400 = vld [vmem:[#allocation14 + $0x10] sm:$0xff]
    %v2401 = vld [vmem:[#allocation14 + $0x18] sm:$0xff]
    %v2402 = vld [vmem:[#allocation14 + $0x20] sm:$0xff]
    %v2403 = vld [vmem:[#allocation14 + $0x28] sm:$0xff]
    %v2404 = vld [vmem:[#allocation14 + $0x30] sm:$0xff]
    %v2405 = vld [vmem:[#allocation14 + $0x38] sm:$0xff]
    %v2406 = vld [vmem:[%s17] sm:$0x3]
    %v2408 = vlaneseq
    %v2409 = vshrl.u32 %v2408, 7
    %v2410 = vsub.s32 0, %v2409
    %v2411 = vrot.slane %v2406, %v2410
    %v2412 = vlaneseq
    %v2413 = vshrl.u32 %v2412, 7
    %v2414 = vsub.s32 1, %v2413
    %v2415 = vrot.slane %v2406, %v2414
    %v2419 = vsel %vm212, %v2397, 0
    %2421 = vmatprep.subr.mxu0 %v2399
    %2422 = vmatpush1.msra.mxu0 %v2398
    %2423 = vmatprep.subr.mxu0 %v2401
    %2424 = vmatpush1.msra.mxu0 %v2400
    %2425 = vmatprep.subr.mxu0 %v2403
    %2426 = vmatpush1.msra.mxu0 %v2402
    %2427 = vmatprep.subr.mxu0 %v2405
    %2428 = vmatpush1.msra.mxu0 %v2404
    %2429 = vmatprep.subr.mxu0 0.0
    %2430 = vmatpush1.msra.mxu0 0.0
    %2431 = vmatprep.subr.mxu0 0.0
    %2432 = vmatpush1.msra.mxu0 0.0
    %2433 = vmatprep.subr.mxu0 0.0
    %2434 = vmatpush1.msra.mxu0 0.0
    %2435 = vmatprep.subr.mxu0 0.0
    %2436 = vmatpush1.msra.mxu0 0.0
    %2437 = vmatprep.subr.mxu0 0.0
    %2438 = vmatpush1.msra.mxu0 0.0
    %2439 = vmatprep.subr.mxu0 0.0
    %2440 = vmatpush1.msra.mxu0 0.0
    %2441 = vmatprep.subr.mxu0 0.0
    %2442 = vmatpush1.msra.mxu0 0.0
    %2443 = vmatprep.subr.mxu0 0.0
    %2444 = vmatpush1.msra.mxu0 0.0
    %2445 = vmatprep.subr.mxu0 0.0
    %2446 = vmatpush1.msra.mxu0 0.0
    %2447 = vmatprep.subr.mxu0 0.0
    %2448 = vmatpush1.msra.mxu0 0.0
    %2449 = vmatprep.subr.mxu0 0.0
    %2450 = vmatpush1.msra.mxu0 0.0
    %2451 = vmatprep.subr.mxu0 0.0
    %2452 = vmatpush1.msra.mxu0 0.0
    %2453 = vmatprep.subr.mxu0 0.0
    %2454 = vmatpush1.msra.mxu0 0.0
    %2455 = vmatprep.subr.mxu0 0.0
    %2456 = vmatpush1.msra.mxu0 0.0
    %2457 = vmatprep.subr.mxu0 0.0
    %2458 = vmatpush1.msra.mxu0 0.0
    %2459 = vmatprep.subr.mxu0 0.0
    %2460 = vmatpush1.msra.mxu0 0.0
    %2461 = vmatprep.subr.mxu0 0.0
    %2462 = vmatpush1.msra.mxu0 0.0
    %2463 = vmatprep.subr.mxu0 0.0
    %2464 = vmatpush1.msra.mxu0 0.0
    %2465 = vmatprep.subr.mxu0 0.0
    %2466 = vmatpush1.msra.mxu0 0.0
    %2467 = vmatprep.subr.mxu0 0.0
    %2468 = vmatpush1.msra.mxu0 0.0
    %2469 = vmatprep.subr.mxu0 0.0
    %2470 = vmatpush1.msra.mxu0 0.0
    %2471 = vmatprep.subr.mxu0 0.0
    %2472 = vmatpush1.msra.mxu0 0.0
    %2473 = vmatprep.subr.mxu0 0.0
    %2474 = vmatpush1.msra.mxu0 0.0
    %2475 = vmatprep.subr.mxu0 0.0
    %2476 = vmatpush1.msra.mxu0 0.0
    %2477 = vmatprep.subr.mxu0 0.0
    %2478 = vmatpush1.msra.mxu0 0.0
    %2479 = vmatprep.subr.mxu0 0.0
    %2480 = vmatpush1.msra.mxu0 0.0
    %2481 = vmatprep.subr.mxu0 0.0
    %2482 = vmatpush1.msra.mxu0 0.0
    %2483 = vmatprep.subr.mxu0 0.0
    %2484 = vmatpush1.msra.mxu0 0.0
    %2485 = vmatprep.mubr.f32.mxu0 0.0
    %2486 = vmatmul.mubr.f32.gmra.mrb[0].mxu0 %v2419
    %v2487 = vpop.f32.mrb[0].mxu0
    %v2488 = vadd.f32 %v2411, %v2487
    %v2489 = vpop.f32.mrb[0].mxu0
    %v2490 = vadd.f32 %v2415, %v2489
    %2491 = vdwg.mxu0
    %v2494 = vcombine.low %v2488, %v2490
    %v2496 = vunpack.c.l.s4 1983009808
    %v2497 = vunpack.c.0.s8 %v2496
    %v2498 = vlaneseq
    %v2499 = vshrl.u32 %v2498, 7
    %v2500 = vsub.s32 %v2497, %v2499
    %v2501 = vrot.slane %v2494, %v2500
    %2503 = vst [vmem:[#allocation16] sm:$0xf] %v2501
    // Predicated region
    $region106: #{tpu_custom_call.1} parent=1 // pred_check
      _
    $region107: #{tpu_custom_call.1} parent=1 // pred_check_branch
      %2505 = sbr.rel (0) target = $region109
    $region108: #{tpu_custom_call.1} parent=1 // pred_region
      %s2507 = ssub.s32 64, 64
      %2508 = vsyncadd [#allocation4], %s2507
      %s2510 = sshll.u32 [#allocation16], 4
      %s2511 = int_to_ptr.vmem [resolvable:$true] %s2510
      %2513 = dma.vmem_to_hbm [thread:$0]  %s2511, 64, %s18, [#allocation4]
    $region109: #{tpu_custom_call.1} parent=1 // pred_fallthru
      _
    // Predicated region
    $region110: #{tpu_custom_call.1} parent=1 // pred_check
      _
    $region111: #{tpu_custom_call.1} parent=1 // pred_check_branch
      %2515 = sbr.rel (0) target = $region113
    $region112: #{tpu_custom_call.1} parent=1 // pred_region
      %2516 = dma.done [#allocation4], 64
    $region113: #{tpu_custom_call.1} parent=1 // pred_fallthru
      _
    %2517 = vsyncpa [#allocation3], 1
    %2518 = vsyncpa [#allocation6], 1
    %2519 = vsyncpa [#allocation9], 1
    %2520 = vsyncpa [#allocation12], 1
    %2521 = vsyncpa [#allocation15], 1
    %2522 = vsyncpa [#allocation4], 1

</llo_original>
